<compile_context>
chip_gen: v7x
topology: tpu7x:2x2x1
jax: 0.10.0
libtpu: 0.0.40
codegen_flags: <defaults>
</compile_context>

<pallas_src>
import jax
import jax.numpy as jnp
from jax.experimental import pallas as pl
from jax.experimental.pallas import tpu as pltpu


D_IN = 256 * 3 * 3                    # 2304, fixed by the module
DROP_P = 0.5                          # nn.Dropout(0.5)
_KEEP_SCALE = 1.0 / (1.0 - DROP_P)    # inverted-dropout scale, folded into w1/w2


def _round_up(n, m):
    return ((n + m - 1) // m) * m


def _encoder_kernel(x_ref, m0_ref, m1_ref, eps_ref,
                    w1_ref, b1_ref, w2_ref, b2_ref, wh_ref, bh_ref,
                    rp_ref):
    """One batch tile: dropout -> fc1 -> relu -> dropout -> fc2 -> relu
    -> fused (mu | logVar) head -> reparameterize."""
    bf = jnp.bfloat16

    # Dropout(0.5): keep-scale pre-folded into w1, mask is bf16 {0,1}.
    # (v5e note: keep this elementwise stage in f32 there - no bf16 VALU.)
    xb = x_ref[...].astype(bf) * m0_ref[...]
    h = jnp.dot(xb, w1_ref[...], preferred_element_type=jnp.float32) + b1_ref[...]
    h = jnp.maximum(h, 0.0)

    # Dropout(0.5) -> Linear(H1, H1) -> ReLU (keep-scale folded into w2).
    hb = h.astype(bf) * m1_ref[...]
    h = jnp.dot(hb, w2_ref[...], preferred_element_type=jnp.float32) + b2_ref[...]
    h = jnp.maximum(h, 0.0)

    # Fused lane-padded head [mu | pad | logVar | pad]: one MXU matmul, split at
    # a 128-aligned offset, then rp = mu + exp(logVar / 2) * eps.
    head = jnp.dot(h.astype(bf), wh_ref[...],
                   preferred_element_type=jnp.float32) + bh_ref[...]
    h2p = head.shape[-1] // 2
    mu = head[:, :h2p]
    logvar = head[:, h2p:]
    rp_ref[...] = mu + jnp.exp(logvar * 0.5) * eps_ref[...]


def prepare_encoder_params(w1, b1, w2, b2, w_mu, b_mu, w_var, b_var):
    """Pack (in, out)-layout Linear parameters into the kernel layout:
    bf16 weights with the dropout keep-scale folded in, plus a fused,
    128-lane-padded (mu | logVar) head."""
    H1 = w1.shape[1]
    H2 = w_mu.shape[1]
    H2p = _round_up(H2, 128)

    def pad_cols(a, n):
        return jnp.pad(a, ((0, 0), (0, n - a.shape[1])))

    w_head = jnp.concatenate(
        [pad_cols(w_mu, H2p), pad_cols(w_var, H2p)], axis=1).astype(jnp.bfloat16)
    b_head = jnp.concatenate(
        [pad_cols(b_mu.reshape(1, -1), H2p), pad_cols(b_var.reshape(1, -1), H2p)],
        axis=1).astype(jnp.float32)

    return dict(
        w1=(w1 * _KEEP_SCALE).astype(jnp.bfloat16),
        b1=b1.reshape(1, -1).astype(jnp.float32),
        w2=(w2 * _KEEP_SCALE).astype(jnp.bfloat16),
        b2=b2.reshape(1, -1).astype(jnp.float32),
        w_head=w_head, b_head=b_head,
        h1=H1, h2=H2, h2p=H2p,
    )


def _invariant_spec(shape):
    """Block-invariant operand: fetched once; single-buffered when supported."""
    index_map = lambda i: (0,) * len(shape)
    try:
        return pl.BlockSpec(shape, index_map, pipeline_mode=pl.Buffered(1))
    except (TypeError, ValueError):
        # pipeline_mode / Buffered(1) unsupported in this jax build -> default.
        return pl.BlockSpec(shape, index_map)


def _vmem_limit_bytes(tm, d_in, h1, h2p, cap_bytes):
    """Shape-derived VMEM budget: single-buffered bf16 weights + f32 biases,
    double-buffered per-tile I/O, in-kernel intermediates, 20% + 4 MiB slack."""
    w_bytes = 2 * (d_in * h1 + h1 * h1 + h1 * 2 * h2p) + 4 * (2 * h1 + 2 * h2p)
    io_bytes = 2 * tm * (4 * d_in + 2 * d_in + 2 * h1 + 4 * h2p + 4 * 2 * h2p)
    tmp_bytes = tm * (2 * d_in + 4 * h1 + 2 * h1 + 4 * 2 * h2p)
    need = int(1.2 * (w_bytes + io_bytes + tmp_bytes)) + (4 << 20)
    return max(32 << 20, min(cap_bytes, need))


def encoder_forward(x, m0, m1, eps, params, *, batch_tile=128,
                    vmem_cap_bytes=100 * 1024 * 1024):
    """Encoder forward (training mode) as one batch-tiled Pallas call.

    x:   (B, 2304) f32 flattened features
    m0:  (B, 2304) bf16 {0,1} keep-mask for the first Dropout(0.5)
    m1:  (B, H1)   bf16 {0,1} keep-mask for the second Dropout(0.5)
    eps: (B, H2)   f32 standard-normal noise for Normal(mu, std).rsample()
    params: output of prepare_encoder_params()
    batch_tile: 128 default; 256 pays off on v6e for large B, 64 relieves VMEM
                on v7x if weights stay resident.
    """
    B, d_in = x.shape
    H1, H2, H2p = params["h1"], params["h2"], params["h2p"]

    # bf16-friendly (16-row) batch tile; batch axis is "parallel" so large B
    # pipelines and can shard across v7x's two TensorCores.
    tm = min(batch_tile, _round_up(B, 16))
    Bp = _round_up(B, tm)
    if Bp != B:
        pad = Bp - B
        x = jnp.pad(x, ((0, pad), (0, 0)))
        m0 = jnp.pad(m0, ((0, pad), (0, 0)))
        m1 = jnp.pad(m1, ((0, pad), (0, 0)))
        eps = jnp.pad(eps, ((0, pad), (0, 0)))
    if H2p != H2:
        eps = jnp.pad(eps, ((0, 0), (0, H2p - H2)))
    grid = (Bp // tm,)

    in_specs = [
        pl.BlockSpec((tm, d_in), lambda i: (i, 0)),      # x     (batch-tiled)
        pl.BlockSpec((tm, d_in), lambda i: (i, 0)),      # m0
        pl.BlockSpec((tm, H1), lambda i: (i, 0)),        # m1
        pl.BlockSpec((tm, H2p), lambda i: (i, 0)),       # eps
        _invariant_spec((d_in, H1)),                     # w1    (block-invariant)
        _invariant_spec((1, H1)),                        # b1
        _invariant_spec((H1, H1)),                       # w2
        _invariant_spec((1, H1)),                        # b2
        _invariant_spec((H1, 2 * H2p)),                  # w_head (mu|logVar fused)
        _invariant_spec((1, 2 * H2p)),                   # b_head
    ]
    out_specs = pl.BlockSpec((tm, H2p), lambda i: (i, 0))
    out_shape = jax.ShapeDtypeStruct((Bp, H2p), jnp.float32)

    flops = 2 * Bp * (d_in * H1 + H1 * H1 + H1 * 2 * H2p)
    bytes_accessed = (
        2 * (d_in * H1 + H1 * H1 + H1 * 2 * H2p)     # bf16 weights
        + 4 * (2 * H1 + 2 * H2p)                     # f32 biases
        + 4 * Bp * (d_in + 2 * H2p)                  # x, eps in; rp out (f32)
        + 2 * Bp * (d_in + H1)                       # bf16 dropout masks
    )
    cost = pl.CostEstimate(flops=flops, transcendentals=Bp * H2p,
                           bytes_accessed=bytes_accessed)

    rp = pl.pallas_call(
        _encoder_kernel,
        out_shape=out_shape,
        grid=grid,
        in_specs=in_specs,
        out_specs=out_specs,
        compiler_params=pltpu.CompilerParams(
            dimension_semantics=("parallel",),
            vmem_limit_bytes=_vmem_limit_bytes(tm, d_in, H1, H2p, vmem_cap_bytes),
        ),
        cost_estimate=cost,
    )(x, m0, m1, eps,
      params["w1"], params["b1"], params["w2"], params["b2"],
      params["w_head"], params["b_head"])

    return rp[:B, :H2]


def _linear_params(key, fan_in, fan_out):
    """PyTorch nn.Linear default init: U(-1/sqrt(fan_in), 1/sqrt(fan_in));
    weight returned as (fan_in, fan_out), i.e. already transposed for x @ W."""
    kw, kb = jax.random.split(key)
    bound = 1.0 / jnp.sqrt(jnp.float32(fan_in))
    w = jax.random.uniform(kw, (fan_in, fan_out), jnp.float32, -bound, bound)
    b = jax.random.uniform(kb, (fan_out,), jnp.float32, -bound, bound)
    return w, b


def _ref_forward(x, m0, m1, eps, params):
    """Pure-JAX reference with the same folded-scale bf16-weight / f32-accumulate
    math as the kernel (same masks, same noise)."""
    bf = jnp.bfloat16
    H2, H2p = params["h2"], params["h2p"]
    h = jnp.dot(x.astype(bf) * m0, params["w1"],
                preferred_element_type=jnp.float32) + params["b1"]
    h = jnp.maximum(h, 0.0)
    h = jnp.dot(h.astype(bf) * m1, params["w2"],
                preferred_element_type=jnp.float32) + params["b2"]
    h = jnp.maximum(h, 0.0)
    head = jnp.dot(h.astype(bf), params["w_head"],
                   preferred_element_type=jnp.float32) + params["b_head"]
    mu, logvar = head[:, :H2p], head[:, H2p:]
    eps_p = jnp.pad(eps, ((0, 0), (0, H2p - H2)))
    rp = mu + jnp.exp(logvar * 0.5) * eps_p
    return rp[:, :H2]


if __name__ == "__main__":
    # Small-but-consistent shapes: input features are fixed by the module
    # (256*3*3 = 2304); hidden sizes are constructor args -> small values here.
    B = 2
    H1 = 256      # hidden_n_1 (module default 4096)
    H2 = 128      # hidden_n_2 (module default 400)

    root = jax.random.PRNGKey(0)
    kx, keps, km0, km1, k1, k2, kmu, kvar = jax.random.split(root, 8)

    x = jax.random.normal(kx, (B, D_IN), jnp.float32)
    eps = jax.random.normal(keps, (B, H2), jnp.float32)        # rsample() noise
    # Bernoulli(keep=0.5) dropout keep-masks, {0,1} in bf16 (the 2x keep-scale
    # is folded into the weights at prep time).
    m0 = jax.random.bernoulli(km0, 1.0 - DROP_P, (B, D_IN)).astype(jnp.bfloat16)
    m1 = jax.random.bernoulli(km1, 1.0 - DROP_P, (B, H1)).astype(jnp.bfloat16)

    w1, b1 = _linear_params(k1, D_IN, H1)
    w2, b2 = _linear_params(k2, H1, H1)
    wmu, bmu = _linear_params(kmu, H1, H2)
    wvar, bvar = _linear_params(kvar, H1, H2)

    params = prepare_encoder_params(w1, b1, w2, b2, wmu, bmu, wvar, bvar)

    rp = encoder_forward(x, m0, m1, eps, params)
    jax.block_until_ready(rp)

    rp_ref = _ref_forward(x, m0, m1, eps, params)

    assert rp.shape == (B, H2)
    max_err = float(jnp.max(jnp.abs(rp - rp_ref)))
    assert jnp.allclose(rp, rp_ref, atol=1e-2, rtol=1e-2), max_err
    print("KERNEL_OK")
</pallas_src>

<mosaic_0001>
module attributes {stable_mosaic.version = 11 : i64} {
  func.func @_encoder_kernel(%arg0: i32, %arg1: memref<16x2304xf32, #tpu.memory_space<vmem>>, %arg2: memref<16x2304xbf16, #tpu.memory_space<vmem>>, %arg3: memref<16x256xbf16, #tpu.memory_space<vmem>>, %arg4: memref<16x128xf32, #tpu.memory_space<vmem>>, %arg5: memref<2304x256xbf16, #tpu.memory_space<vmem>>, %arg6: memref<1x256xf32, #tpu.memory_space<vmem>>, %arg7: memref<256x256xbf16, #tpu.memory_space<vmem>>, %arg8: memref<1x256xf32, #tpu.memory_space<vmem>>, %arg9: memref<256x256xbf16, #tpu.memory_space<vmem>>, %arg10: memref<1x256xf32, #tpu.memory_space<vmem>>, %arg11: memref<16x128xf32, #tpu.memory_space<vmem>>) attributes {dimension_semantics = [#tpu.dimension_semantics<parallel>], iteration_bounds = array<i64: 1>, scalar_prefetch = 0 : i64, scratch_operands = 0 : i64, tpu.core_type = #tpu.core_type<tc>, window_params = [{transform_indices = @transform_0, window_bounds = array<i64: 16, 2304>}, {transform_indices = @transform_1, window_bounds = array<i64: 16, 2304>}, {transform_indices = @transform_2, window_bounds = array<i64: 16, 256>}, {transform_indices = @transform_3, window_bounds = array<i64: 16, 128>}, {pipeline_mode = #tpu.pipeline_mode<synchronous>, transform_indices = @transform_4, window_bounds = array<i64: 2304, 256>}, {pipeline_mode = #tpu.pipeline_mode<synchronous>, transform_indices = @transform_5, window_bounds = array<i64: 1, 256>}, {pipeline_mode = #tpu.pipeline_mode<synchronous>, transform_indices = @transform_6, window_bounds = array<i64: 256, 256>}, {pipeline_mode = #tpu.pipeline_mode<synchronous>, transform_indices = @transform_7, window_bounds = array<i64: 1, 256>}, {pipeline_mode = #tpu.pipeline_mode<synchronous>, transform_indices = @transform_8, window_bounds = array<i64: 256, 256>}, {pipeline_mode = #tpu.pipeline_mode<synchronous>, transform_indices = @transform_9, window_bounds = array<i64: 1, 256>}, {transform_indices = @transform_10, window_bounds = array<i64: 16, 128>}]} {
    %c0 = arith.constant 0 : index
    %c0_0 = arith.constant 0 : index
    %0 = vector.load %arg1[%c0, %c0_0] : memref<16x2304xf32, #tpu.memory_space<vmem>>, vector<16x2304xf32>
    %1 = arith.truncf %0 : vector<16x2304xf32> to vector<16x2304xbf16>
    %c0_1 = arith.constant 0 : index
    %c0_2 = arith.constant 0 : index
    %2 = vector.load %arg2[%c0_1, %c0_2] : memref<16x2304xbf16, #tpu.memory_space<vmem>>, vector<16x2304xbf16>
    %3 = arith.mulf %1, %2 : vector<16x2304xbf16>
    %c0_3 = arith.constant 0 : index
    %c0_4 = arith.constant 0 : index
    %4 = vector.load %arg5[%c0_3, %c0_4] : memref<2304x256xbf16, #tpu.memory_space<vmem>>, vector<2304x256xbf16>
    %cst = arith.constant dense<0.000000e+00> : vector<16x256xf32>
    %5 = tpu.matmul %3, %4, %cst {dimension_numbers = #tpu.dot_dimension_numbers<[1], [0], [0], [1], [0, 0, 1, 1], [], []>} : vector<16x2304xbf16>, vector<2304x256xbf16>, vector<16x256xf32> -> vector<16x256xf32>
    %c0_5 = arith.constant 0 : index
    %c0_6 = arith.constant 0 : index
    %6 = vector.load %arg6[%c0_5, %c0_6] : memref<1x256xf32, #tpu.memory_space<vmem>>, vector<1x256xf32>
    %7 = vector.broadcast %6 : vector<1x256xf32> to vector<16x256xf32>
    %8 = arith.addf %5, %7 : vector<16x256xf32>
    %cst_7 = arith.constant 0.000000e+00 : f32
    %9 = vector.broadcast %cst_7 : f32 to vector<16x256xf32>
    %10 = arith.maximumf %8, %9 : vector<16x256xf32>
    %11 = arith.truncf %10 : vector<16x256xf32> to vector<16x256xbf16>
    %c0_8 = arith.constant 0 : index
    %c0_9 = arith.constant 0 : index
    %12 = vector.load %arg3[%c0_8, %c0_9] : memref<16x256xbf16, #tpu.memory_space<vmem>>, vector<16x256xbf16>
    %13 = arith.mulf %11, %12 : vector<16x256xbf16>
    %c0_10 = arith.constant 0 : index
    %c0_11 = arith.constant 0 : index
    %14 = vector.load %arg7[%c0_10, %c0_11] : memref<256x256xbf16, #tpu.memory_space<vmem>>, vector<256x256xbf16>
    %cst_12 = arith.constant dense<0.000000e+00> : vector<16x256xf32>
    %15 = tpu.matmul %13, %14, %cst_12 {dimension_numbers = #tpu.dot_dimension_numbers<[1], [0], [0], [1], [0, 0, 1, 1], [], []>} : vector<16x256xbf16>, vector<256x256xbf16>, vector<16x256xf32> -> vector<16x256xf32>
    %c0_13 = arith.constant 0 : index
    %c0_14 = arith.constant 0 : index
    %16 = vector.load %arg8[%c0_13, %c0_14] : memref<1x256xf32, #tpu.memory_space<vmem>>, vector<1x256xf32>
    %17 = vector.broadcast %16 : vector<1x256xf32> to vector<16x256xf32>
    %18 = arith.addf %15, %17 : vector<16x256xf32>
    %cst_15 = arith.constant 0.000000e+00 : f32
    %19 = vector.broadcast %cst_15 : f32 to vector<16x256xf32>
    %20 = arith.maximumf %18, %19 : vector<16x256xf32>
    %21 = arith.truncf %20 : vector<16x256xf32> to vector<16x256xbf16>
    %c0_16 = arith.constant 0 : index
    %c0_17 = arith.constant 0 : index
    %22 = vector.load %arg9[%c0_16, %c0_17] : memref<256x256xbf16, #tpu.memory_space<vmem>>, vector<256x256xbf16>
    %cst_18 = arith.constant dense<0.000000e+00> : vector<16x256xf32>
    %23 = tpu.matmul %21, %22, %cst_18 {dimension_numbers = #tpu.dot_dimension_numbers<[1], [0], [0], [1], [0, 0, 1, 1], [], []>} : vector<16x256xbf16>, vector<256x256xbf16>, vector<16x256xf32> -> vector<16x256xf32>
    %c0_19 = arith.constant 0 : index
    %c0_20 = arith.constant 0 : index
    %24 = vector.load %arg10[%c0_19, %c0_20] : memref<1x256xf32, #tpu.memory_space<vmem>>, vector<1x256xf32>
    %25 = vector.broadcast %24 : vector<1x256xf32> to vector<16x256xf32>
    %26 = arith.addf %23, %25 : vector<16x256xf32>
    %27 = vector.extract_strided_slice %26 {offsets = [0, 0], sizes = [16, 128], strides = [1, 1]} : vector<16x256xf32> to vector<16x128xf32>
    %28 = vector.extract_strided_slice %26 {offsets = [0, 128], sizes = [16, 128], strides = [1, 1]} : vector<16x256xf32> to vector<16x128xf32>
    %cst_21 = arith.constant 5.000000e-01 : f32
    %29 = vector.broadcast %cst_21 : f32 to vector<16x128xf32>
    %30 = arith.mulf %28, %29 : vector<16x128xf32>
    %31 = math.exp %30 : vector<16x128xf32>
    %c0_22 = arith.constant 0 : index
    %c0_23 = arith.constant 0 : index
    %32 = vector.load %arg4[%c0_22, %c0_23] : memref<16x128xf32, #tpu.memory_space<vmem>>, vector<16x128xf32>
    %33 = arith.mulf %31, %32 : vector<16x128xf32>
    %34 = arith.addf %27, %33 : vector<16x128xf32>
    %c0_24 = arith.constant 0 : index
    %c0_25 = arith.constant 0 : index
    %35 = vector.load %arg11[%c0_24, %c0_25] : memref<16x128xf32, #tpu.memory_space<vmem>>, vector<16x128xf32>
    tpu.vector_store %arg11[%c0_24, %c0_25], %34 {strides = array<i32>} : memref<16x128xf32, #tpu.memory_space<vmem>>, vector<16x128xf32>,
    return
  }
  func.func @transform_0(%arg0: i32) -> (i32, i32) {
    %c0_i32 = arith.constant 0 : i32
    %c0_i32_0 = arith.constant 0 : i32
    return %arg0, %c0_i32 : i32, i32
  }
  func.func @transform_1(%arg0: i32) -> (i32, i32) {
    %c0_i32 = arith.constant 0 : i32
    %c0_i32_0 = arith.constant 0 : i32
    return %arg0, %c0_i32 : i32, i32
  }
  func.func @transform_2(%arg0: i32) -> (i32, i32) {
    %c0_i32 = arith.constant 0 : i32
    %c0_i32_0 = arith.constant 0 : i32
    return %arg0, %c0_i32 : i32, i32
  }
  func.func @transform_3(%arg0: i32) -> (i32, i32) {
    %c0_i32 = arith.constant 0 : i32
    %c0_i32_0 = arith.constant 0 : i32
    return %arg0, %c0_i32 : i32, i32
  }
  func.func @transform_4(%arg0: i32) -> (i32, i32) {
    %c0_i32 = arith.constant 0 : i32
    %c0_i32_0 = arith.constant 0 : i32
    %c0_i32_1 = arith.constant 0 : i32
    return %c0_i32, %c0_i32_0 : i32, i32
  }
  func.func @transform_5(%arg0: i32) -> (i32, i32) {
    %c0_i32 = arith.constant 0 : i32
    %c0_i32_0 = arith.constant 0 : i32
    %c0_i32_1 = arith.constant 0 : i32
    return %c0_i32, %c0_i32_0 : i32, i32
  }
  func.func @transform_6(%arg0: i32) -> (i32, i32) {
    %c0_i32 = arith.constant 0 : i32
    %c0_i32_0 = arith.constant 0 : i32
    %c0_i32_1 = arith.constant 0 : i32
    return %c0_i32, %c0_i32_0 : i32, i32
  }
  func.func @transform_7(%arg0: i32) -> (i32, i32) {
    %c0_i32 = arith.constant 0 : i32
    %c0_i32_0 = arith.constant 0 : i32
    %c0_i32_1 = arith.constant 0 : i32
    return %c0_i32, %c0_i32_0 : i32, i32
  }
  func.func @transform_8(%arg0: i32) -> (i32, i32) {
    %c0_i32 = arith.constant 0 : i32
    %c0_i32_0 = arith.constant 0 : i32
    %c0_i32_1 = arith.constant 0 : i32
    return %c0_i32, %c0_i32_0 : i32, i32
  }
  func.func @transform_9(%arg0: i32) -> (i32, i32) {
    %c0_i32 = arith.constant 0 : i32
    %c0_i32_0 = arith.constant 0 : i32
    %c0_i32_1 = arith.constant 0 : i32
    return %c0_i32, %c0_i32_0 : i32, i32
  }
  func.func @transform_10(%arg0: i32) -> (i32, i32) {
    %c0_i32 = arith.constant 0 : i32
    %c0_i32_0 = arith.constant 0 : i32
    return %arg0, %c0_i32 : i32, i32
  }
}

</mosaic_0001>

<llo_original>
// kernel: tpu_custom_call.1
$region0: #{tpu_custom_call.1}
  #allocation0 [shape = 'u32[]', space=smem, size = 0x4, offset = 0x4, fixed_abs, tag = 'smem constant byte address 0x4 - core index']
  #allocation1 [shape = 'u32[144,128]{1,0:T(1,128)}', space=vmem, size = 0x12000, scoped, tag = 'internal scratch']
  %s0 = inlined_call_operand.hbm [shape: f32[16,2304], index: 0, kind: input, shape index: {}]
  %s1 = inlined_call_operand.hbm [shape: bf16[16,2304], index: 1, kind: input, shape index: {}]
  %s2 = inlined_call_operand.hbm [shape: bf16[16,256], index: 2, kind: input, shape index: {}]
  %s3 = inlined_call_operand.hbm [shape: f32[16,128], index: 3, kind: input, shape index: {}]
  %s4 = inlined_call_operand.hbm [shape: bf16[2304,256], index: 4, kind: input, shape index: {}]
  %s5 = inlined_call_operand.hbm [shape: f32[1,256], index: 5, kind: input, shape index: {}]
  %s6 = inlined_call_operand.hbm [shape: bf16[256,256], index: 6, kind: input, shape index: {}]
  %s7 = inlined_call_operand.hbm [shape: f32[1,256], index: 7, kind: input, shape index: {}]
  %s8 = inlined_call_operand.hbm [shape: bf16[256,256], index: 8, kind: input, shape index: {}]
  %s9 = inlined_call_operand.hbm [shape: f32[1,256], index: 9, kind: input, shape index: {}]
  %s10 = inlined_call_operand.hbm [shape: f32[16,128], index: 10, kind: output, shape index: {}]
  %s11 = sld [smem:[#allocation0]]
  $region90: #{tpu_custom_call.1} parent=0
    _
  %s13 = ssub.s32 1, %s11
  %s14 = scalar_select 0, %s13, %s11
  $region1: #{tpu_custom_call.1} parent=0
    #allocation2 [shape = 'u8[147456]{0}', space=vmem, size = 0x24000, scoped, tag = 'input window, operand 0, single buffered']
    #allocation3 [shape = 's32[1]{0}', space=sflag, size = 0x4, scoped, tag = 'scoped memory for tpu_custom_call.1']
    #allocation4 [shape = 's32[1]{0}', space=sflag, size = 0x4, scoped, tag = 'scoped memory for tpu_custom_call.1']
    #allocation5 [shape = 'u8[73728]{0}', space=vmem, size = 0x12000, scoped, tag = 'input window, operand 1, single buffered']
    #allocation6 [shape = 's32[1]{0}', space=sflag, size = 0x4, scoped, tag = 'scoped memory for tpu_custom_call.1']
    #allocation7 [shape = 'u8[8192]{0}', space=vmem, size = 0x2000, scoped, tag = 'input window, operand 2, single buffered']
    #allocation8 [shape = 'u8[8192]{0}', space=vmem, size = 0x2000, scoped, tag = 'input window, operand 3, single buffered']
    #allocation9 [shape = 's32[1]{0}', space=sflag, size = 0x4, scoped, tag = 'scoped memory for tpu_custom_call.1']
    #allocation10 [shape = 'u8[1179648]{0}', space=vmem, size = 0x120000, scoped, tag = 'input window, operand 4, single buffered']
    #allocation11 [shape = 'u8[1024]{0}', space=vmem, size = 0x400, scoped, tag = 'input window, operand 5, single buffered']
    #allocation12 [shape = 's32[1]{0}', space=sflag, size = 0x4, scoped, tag = 'scoped memory for tpu_custom_call.1']
    #allocation13 [shape = 'u8[131072]{0}', space=vmem, size = 0x20000, scoped, tag = 'input window, operand 6, single buffered']
    #allocation14 [shape = 'u8[1024]{0}', space=vmem, size = 0x400, scoped, tag = 'input window, operand 7, single buffered']
    #allocation15 [shape = 's32[1]{0}', space=sflag, size = 0x4, scoped, tag = 'scoped memory for tpu_custom_call.1']
    #allocation16 [shape = 'u8[131072]{0}', space=vmem, size = 0x20000, scoped, tag = 'input window, operand 8, single buffered']
    #allocation17 [shape = 'u8[1024]{0}', space=vmem, size = 0x400, scoped, tag = 'input window, operand 9, single buffered']
    #allocation18 [shape = 's32[1]{0}', space=sflag, size = 0x4, scoped, tag = 'scoped memory for tpu_custom_call.1']
    #allocation19 [shape = 'u8[8192]{0}', space=vmem, size = 0x2000, scoped, tag = 'output window, operand 0, single buffered']
    %15 = vsyncpa [#allocation3], 0
    %16 = vsyncpa [#allocation6], 0
    %17 = vsyncpa [#allocation9], 0
    %18 = vsyncpa [#allocation12], 0
    %19 = vsyncpa [#allocation15], 0
    %20 = vsyncpa [#allocation18], 0
    %21 = vsyncpa [#allocation4], 0
    // Predicated region
    $region2: #{tpu_custom_call.1} parent=1 // pred_check
      _
    $region3: #{tpu_custom_call.1} parent=1 // pred_check_branch
      %23 = sbr.rel (0) target = $region5
    $region4: #{tpu_custom_call.1} parent=1 // pred_region
      %s25 = ssub.s32 4608, 4608
      %26 = vsyncadd [#allocation3], %s25
      %s27 = sshll.u32 [#allocation2], 4
      %s28 = int_to_ptr.vmem [resolvable:$true] %s27
      %33 = dma.hbm_to_vmem [thread:$0]  %s0, 4608, %s28, [#allocation3], 2304, 2304, 144
    $region5: #{tpu_custom_call.1} parent=1 // pred_fallthru
      _
    // Predicated region
    $region6: #{tpu_custom_call.1} parent=1 // pred_check
      _
    $region7: #{tpu_custom_call.1} parent=1 // pred_check_branch
      %35 = sbr.rel (0) target = $region9
    $region8: #{tpu_custom_call.1} parent=1 // pred_region
      %s37 = ssub.s32 2304, 2304
      %38 = vsyncadd [#allocation6], %s37
      %s39 = sshll.u32 [#allocation5], 4
      %s40 = int_to_ptr.vmem [resolvable:$true] %s39
      %45 = dma.hbm_to_vmem [thread:$0]  %s1, 2304, %s40, [#allocation6], 1152, 1152, 72
    $region9: #{tpu_custom_call.1} parent=1 // pred_fallthru
      _
    // Predicated region
    $region10: #{tpu_custom_call.1} parent=1 // pred_check
      _
    $region11: #{tpu_custom_call.1} parent=1 // pred_check_branch
      %47 = sbr.rel (0) target = $region13
    $region12: #{tpu_custom_call.1} parent=1 // pred_region
      %s49 = ssub.s32 256, 256
      %50 = vsyncadd [#allocation6], %s49
      %s51 = sshll.u32 [#allocation7], 4
      %s52 = int_to_ptr.vmem [resolvable:$true] %s51
      %57 = dma.hbm_to_vmem [thread:$0]  %s2, 256, %s52, [#allocation6], 128, 128, 8
    $region13: #{tpu_custom_call.1} parent=1 // pred_fallthru
      _
    // Predicated region
    $region14: #{tpu_custom_call.1} parent=1 // pred_check
      _
    $region15: #{tpu_custom_call.1} parent=1 // pred_check_branch
      %59 = sbr.rel (0) target = $region17
    $region16: #{tpu_custom_call.1} parent=1 // pred_region
      %s61 = ssub.s32 256, 256
      %62 = vsyncadd [#allocation9], %s61
      %s63 = sshll.u32 [#allocation8], 4
      %s64 = int_to_ptr.vmem [resolvable:$true] %s63
      %69 = dma.hbm_to_vmem [thread:$0]  %s3, 256, %s64, [#allocation9], 128, 128, 8
    $region17: #{tpu_custom_call.1} parent=1 // pred_fallthru
      _
    // Predicated region
    $region18: #{tpu_custom_call.1} parent=1 // pred_check
      _
    $region19: #{tpu_custom_call.1} parent=1 // pred_check_branch
      %71 = sbr.rel (0) target = $region21
    $region20: #{tpu_custom_call.1} parent=1 // pred_region
      %s73 = ssub.s32 36864, 36864
      %74 = vsyncadd [#allocation9], %s73
      %s75 = sshll.u32 [#allocation10], 4
      %s76 = int_to_ptr.vmem [resolvable:$true] %s75
      %81 = dma.hbm_to_vmem [thread:$0]  %s4, 36864, %s76, [#allocation9], 128, 128, 8
    $region21: #{tpu_custom_call.1} parent=1 // pred_fallthru
      _
    // Predicated region
    $region22: #{tpu_custom_call.1} parent=1 // pred_check
      _
    $region23: #{tpu_custom_call.1} parent=1 // pred_check_branch
      %83 = sbr.rel (0) target = $region25
    $region24: #{tpu_custom_call.1} parent=1 // pred_region
      %s85 = ssub.s32 32, 32
      %86 = vsyncadd [#allocation12], %s85
      %s88 = sshll.u32 [#allocation11], 4
      %s89 = int_to_ptr.vmem [resolvable:$true] %s88
      %91 = dma.hbm_to_vmem [thread:$0]  %s5, 32, %s89, [#allocation12]
    $region25: #{tpu_custom_call.1} parent=1 // pred_fallthru
      _
    // Predicated region
    $region26: #{tpu_custom_call.1} parent=1 // pred_check
      _
    $region27: #{tpu_custom_call.1} parent=1 // pred_check_branch
      %93 = sbr.rel (0) target = $region29
    $region28: #{tpu_custom_call.1} parent=1 // pred_region
      %s95 = ssub.s32 4096, 4096
      %96 = vsyncadd [#allocation12], %s95
      %s97 = sshll.u32 [#allocation13], 4
      %s98 = int_to_ptr.vmem [resolvable:$true] %s97
      %103 = dma.hbm_to_vmem [thread:$0]  %s6, 4096, %s98, [#allocation12], 128, 128, 8
    $region29: #{tpu_custom_call.1} parent=1 // pred_fallthru
      _
    // Predicated region
    $region30: #{tpu_custom_call.1} parent=1 // pred_check
      _
    $region31: #{tpu_custom_call.1} parent=1 // pred_check_branch
      %105 = sbr.rel (0) target = $region33
    $region32: #{tpu_custom_call.1} parent=1 // pred_region
      %s107 = ssub.s32 32, 32
      %108 = vsyncadd [#allocation15], %s107
      %s110 = sshll.u32 [#allocation14], 4
      %s111 = int_to_ptr.vmem [resolvable:$true] %s110
      %113 = dma.hbm_to_vmem [thread:$0]  %s7, 32, %s111, [#allocation15]
    $region33: #{tpu_custom_call.1} parent=1 // pred_fallthru
      _
    // Predicated region
    $region34: #{tpu_custom_call.1} parent=1 // pred_check
      _
    $region35: #{tpu_custom_call.1} parent=1 // pred_check_branch
      %115 = sbr.rel (0) target = $region37
    $region36: #{tpu_custom_call.1} parent=1 // pred_region
      %s117 = ssub.s32 4096, 4096
      %118 = vsyncadd [#allocation15], %s117
      %s119 = sshll.u32 [#allocation16], 4
      %s120 = int_to_ptr.vmem [resolvable:$true] %s119
      %125 = dma.hbm_to_vmem [thread:$0]  %s8, 4096, %s120, [#allocation15], 128, 128, 8
    $region37: #{tpu_custom_call.1} parent=1 // pred_fallthru
      _
    // Predicated region
    $region38: #{tpu_custom_call.1} parent=1 // pred_check
      _
    $region39: #{tpu_custom_call.1} parent=1 // pred_check_branch
      %127 = sbr.rel (0) target = $region41
    $region40: #{tpu_custom_call.1} parent=1 // pred_region
      %s129 = ssub.s32 32, 32
      %130 = vsyncadd [#allocation18], %s129
      %s132 = sshll.u32 [#allocation17], 4
      %s133 = int_to_ptr.vmem [resolvable:$true] %s132
      %135 = dma.hbm_to_vmem [thread:$0]  %s9, 32, %s133, [#allocation18]
    $region41: #{tpu_custom_call.1} parent=1 // pred_fallthru
      _
    // Predicated region
    $region42: #{tpu_custom_call.1} parent=1 // pred_check
      _
    $region43: #{tpu_custom_call.1} parent=1 // pred_check_branch
      %137 = sbr.rel (0) target = $region45
    $region44: #{tpu_custom_call.1} parent=1 // pred_region
      %138 = dma.done [#allocation3], 4608
    $region45: #{tpu_custom_call.1} parent=1 // pred_fallthru
      _
    // Predicated region
    $region46: #{tpu_custom_call.1} parent=1 // pred_check
      _
    $region47: #{tpu_custom_call.1} parent=1 // pred_check_branch
      %140 = sbr.rel (0) target = $region49
    $region48: #{tpu_custom_call.1} parent=1 // pred_region
      %141 = dma.done [#allocation6], 2304
    $region49: #{tpu_custom_call.1} parent=1 // pred_fallthru
      _
    // Predicated region
    $region50: #{tpu_custom_call.1} parent=1 // pred_check
      _
    $region51: #{tpu_custom_call.1} parent=1 // pred_check_branch
      %143 = sbr.rel (0) target = $region53
    $region52: #{tpu_custom_call.1} parent=1 // pred_region
      %144 = dma.done [#allocation6], 256
    $region53: #{tpu_custom_call.1} parent=1 // pred_fallthru
      _
    // Predicated region
    $region54: #{tpu_custom_call.1} parent=1 // pred_check
      _
    $region55: #{tpu_custom_call.1} parent=1 // pred_check_branch
      %146 = sbr.rel (0) target = $region57
    $region56: #{tpu_custom_call.1} parent=1 // pred_region
      %147 = dma.done [#allocation9], 256
    $region57: #{tpu_custom_call.1} parent=1 // pred_fallthru
      _
    // Predicated region
    $region58: #{tpu_custom_call.1} parent=1 // pred_check
      _
    $region59: #{tpu_custom_call.1} parent=1 // pred_check_branch
      %149 = sbr.rel (0) target = $region61
    $region60: #{tpu_custom_call.1} parent=1 // pred_region
      %150 = dma.done [#allocation9], 36864
    $region61: #{tpu_custom_call.1} parent=1 // pred_fallthru
      _
    // Predicated region
    $region62: #{tpu_custom_call.1} parent=1 // pred_check
      _
    $region63: #{tpu_custom_call.1} parent=1 // pred_check_branch
      %152 = sbr.rel (0) target = $region65
    $region64: #{tpu_custom_call.1} parent=1 // pred_region
      %153 = dma.done [#allocation12], 32
    $region65: #{tpu_custom_call.1} parent=1 // pred_fallthru
      _
    // Predicated region
    $region66: #{tpu_custom_call.1} parent=1 // pred_check
      _
    $region67: #{tpu_custom_call.1} parent=1 // pred_check_branch
      %155 = sbr.rel (0) target = $region69
    $region68: #{tpu_custom_call.1} parent=1 // pred_region
      %156 = dma.done [#allocation12], 4096
    $region69: #{tpu_custom_call.1} parent=1 // pred_fallthru
      _
    // Predicated region
    $region70: #{tpu_custom_call.1} parent=1 // pred_check
      _
    $region71: #{tpu_custom_call.1} parent=1 // pred_check_branch
      %158 = sbr.rel (0) target = $region73
    $region72: #{tpu_custom_call.1} parent=1 // pred_region
      %159 = dma.done [#allocation15], 32
    $region73: #{tpu_custom_call.1} parent=1 // pred_fallthru
      _
    // Predicated region
    $region74: #{tpu_custom_call.1} parent=1 // pred_check
      _
    $region75: #{tpu_custom_call.1} parent=1 // pred_check_branch
      %161 = sbr.rel (0) target = $region77
    $region76: #{tpu_custom_call.1} parent=1 // pred_region
      %162 = dma.done [#allocation15], 4096
    $region77: #{tpu_custom_call.1} parent=1 // pred_fallthru
      _
    // Predicated region
    $region78: #{tpu_custom_call.1} parent=1 // pred_check
      _
    $region79: #{tpu_custom_call.1} parent=1 // pred_check_branch
      %164 = sbr.rel (0) target = $region81
    $region80: #{tpu_custom_call.1} parent=1 // pred_region
      %165 = dma.done [#allocation18], 32
    $region81: #{tpu_custom_call.1} parent=1 // pred_fallthru
      _
    %v166 = vld [vmem:[#allocation2] sm:$0xff]
    %v167 = vld [vmem:[#allocation2 + $0x8] sm:$0xff]
    %v168 = vld [vmem:[#allocation2 + $0x10] sm:$0xff]
    %v169 = vld [vmem:[#allocation2 + $0x18] sm:$0xff]
    %v170 = vld [vmem:[#allocation2 + $0x20] sm:$0xff]
    %v171 = vld [vmem:[#allocation2 + $0x28] sm:$0xff]
    %v172 = vld [vmem:[#allocation2 + $0x30] sm:$0xff]
    %v173 = vld [vmem:[#allocation2 + $0x38] sm:$0xff]
    %v174 = vld [vmem:[#allocation2 + $0x40] sm:$0xff]
    %v175 = vld [vmem:[#allocation2 + $0x48] sm:$0xff]
    %v176 = vld [vmem:[#allocation2 + $0x50] sm:$0xff]
    %v177 = vld [vmem:[#allocation2 + $0x58] sm:$0xff]
    %v178 = vld [vmem:[#allocation2 + $0x60] sm:$0xff]
    %v179 = vld [vmem:[#allocation2 + $0x68] sm:$0xff]
    %v180 = vld [vmem:[#allocation2 + $0x70] sm:$0xff]
    %v181 = vld [vmem:[#allocation2 + $0x78] sm:$0xff]
    %v182 = vld [vmem:[#allocation2 + $0x80] sm:$0xff]
    %v183 = vld [vmem:[#allocation2 + $0x88] sm:$0xff]
    %v184 = vld [vmem:[#allocation2 + $0x90] sm:$0xff]
    %v185 = vld [vmem:[#allocation2 + $0x98] sm:$0xff]
    %v186 = vld [vmem:[#allocation2 + $0xa0] sm:$0xff]
    %v187 = vld [vmem:[#allocation2 + $0xa8] sm:$0xff]
    %v188 = vld [vmem:[#allocation2 + $0xb0] sm:$0xff]
    %v189 = vld [vmem:[#allocation2 + $0xb8] sm:$0xff]
    %v190 = vld [vmem:[#allocation2 + $0xc0] sm:$0xff]
    %v191 = vld [vmem:[#allocation2 + $0xc8] sm:$0xff]
    %v192 = vld [vmem:[#allocation2 + $0xd0] sm:$0xff]
    %v193 = vld [vmem:[#allocation2 + $0xd8] sm:$0xff]
    %v194 = vld [vmem:[#allocation2 + $0xe0] sm:$0xff]
    %v195 = vld [vmem:[#allocation2 + $0xe8] sm:$0xff]
    %v196 = vld [vmem:[#allocation2 + $0xf0] sm:$0xff]
    %v197 = vld [vmem:[#allocation2 + $0xf8] sm:$0xff]
    %v198 = vld [vmem:[#allocation2 + $0x100] sm:$0xff]
    %v199 = vld [vmem:[#allocation2 + $0x108] sm:$0xff]
    %v200 = vld [vmem:[#allocation2 + $0x110] sm:$0xff]
    %v201 = vld [vmem:[#allocation2 + $0x118] sm:$0xff]
    %v202 = vpack.c.bf16 %v184, %v166
    %v203 = vpack.c.bf16 %v185, %v167
    %v204 = vpack.c.bf16 %v186, %v168
    %v205 = vpack.c.bf16 %v187, %v169
    %v206 = vpack.c.bf16 %v188, %v170
    %v207 = vpack.c.bf16 %v189, %v171
    %v208 = vpack.c.bf16 %v190, %v172
    %v209 = vpack.c.bf16 %v191, %v173
    %v210 = vpack.c.bf16 %v192, %v174
    %v211 = vpack.c.bf16 %v193, %v175
    %v212 = vpack.c.bf16 %v194, %v176
    %v213 = vpack.c.bf16 %v195, %v177
    %v214 = vpack.c.bf16 %v196, %v178
    %v215 = vpack.c.bf16 %v197, %v179
    %v216 = vpack.c.bf16 %v198, %v180
    %v217 = vpack.c.bf16 %v199, %v181
    %v218 = vpack.c.bf16 %v200, %v182
    %v219 = vpack.c.bf16 %v201, %v183
    %v220 = vld [vmem:[#allocation5] sm:$0xff]
    %v221 = vld [vmem:[#allocation5 + $0x8] sm:$0xff]
    %v222 = vld [vmem:[#allocation5 + $0x10] sm:$0xff]
    %v223 = vld [vmem:[#allocation5 + $0x18] sm:$0xff]
    %v224 = vld [vmem:[#allocation5 + $0x20] sm:$0xff]
    %v225 = vld [vmem:[#allocation5 + $0x28] sm:$0xff]
    %v226 = vld [vmem:[#allocation5 + $0x30] sm:$0xff]
    %v227 = vld [vmem:[#allocation5 + $0x38] sm:$0xff]
    %v228 = vld [vmem:[#allocation5 + $0x40] sm:$0xff]
    %v229 = vld [vmem:[#allocation5 + $0x48] sm:$0xff]
    %v230 = vld [vmem:[#allocation5 + $0x50] sm:$0xff]
    %v231 = vld [vmem:[#allocation5 + $0x58] sm:$0xff]
    %v232 = vld [vmem:[#allocation5 + $0x60] sm:$0xff]
    %v233 = vld [vmem:[#allocation5 + $0x68] sm:$0xff]
    %v234 = vld [vmem:[#allocation5 + $0x70] sm:$0xff]
    %v235 = vld [vmem:[#allocation5 + $0x78] sm:$0xff]
    %v236 = vld [vmem:[#allocation5 + $0x80] sm:$0xff]
    %v237 = vld [vmem:[#allocation5 + $0x88] sm:$0xff]
    %v256 = vunpack.c.l.b16 %v220
    %v257 = vunpack.c.h.b16 %v220
    %v258 = vunpack.c.l.b16 %v221
    %v259 = vunpack.c.h.b16 %v221
    %v260 = vunpack.c.l.b16 %v222
    %v261 = vunpack.c.h.b16 %v222
    %v262 = vunpack.c.l.b16 %v223
    %v263 = vunpack.c.h.b16 %v223
    %v264 = vunpack.c.l.b16 %v224
    %v265 = vunpack.c.h.b16 %v224
    %v266 = vunpack.c.l.b16 %v225
    %v267 = vunpack.c.h.b16 %v225
    %v268 = vunpack.c.l.b16 %v226
    %v269 = vunpack.c.h.b16 %v226
    %v270 = vunpack.c.l.b16 %v227
    %v271 = vunpack.c.h.b16 %v227
    %v272 = vunpack.c.l.b16 %v228
    %v273 = vunpack.c.h.b16 %v228
    %v274 = vunpack.c.l.b16 %v229
    %v275 = vunpack.c.h.b16 %v229
    %v276 = vunpack.c.l.b16 %v230
    %v277 = vunpack.c.h.b16 %v230
    %v278 = vunpack.c.l.b16 %v231
    %v279 = vunpack.c.h.b16 %v231
    %v280 = vunpack.c.l.b16 %v232
    %v281 = vunpack.c.h.b16 %v232
    %v282 = vunpack.c.l.b16 %v233
    %v283 = vunpack.c.h.b16 %v233
    %v284 = vunpack.c.l.b16 %v234
    %v285 = vunpack.c.h.b16 %v234
    %v286 = vunpack.c.l.b16 %v235
    %v287 = vunpack.c.h.b16 %v235
    %v288 = vunpack.c.l.b16 %v236
    %v289 = vunpack.c.h.b16 %v236
    %v290 = vunpack.c.l.b16 %v237
    %v291 = vunpack.c.h.b16 %v237
    %v292 = vpack.c.b16 %v274, %v256
    %v293 = vpack.c.b16 %v275, %v257
    %v294 = vpack.c.b16 %v276, %v258
    %v295 = vpack.c.b16 %v277, %v259
    %v296 = vpack.c.b16 %v278, %v260
    %v297 = vpack.c.b16 %v279, %v261
    %v298 = vpack.c.b16 %v280, %v262
    %v299 = vpack.c.b16 %v281, %v263
    %v300 = vpack.c.b16 %v282, %v264
    %v301 = vpack.c.b16 %v283, %v265
    %v302 = vpack.c.b16 %v284, %v266
    %v303 = vpack.c.b16 %v285, %v267
    %v304 = vpack.c.b16 %v286, %v268
    %v305 = vpack.c.b16 %v287, %v269
    %v306 = vpack.c.b16 %v288, %v270
    %v307 = vpack.c.b16 %v289, %v271
    %v308 = vpack.c.b16 %v290, %v272
    %v309 = vpack.c.b16 %v291, %v273
    %v328 = vmul.bf16 %v202, %v292
    %v329 = vmul.bf16 %v203, %v293
    %v330 = vmul.bf16 %v204, %v294
    %v331 = vmul.bf16 %v205, %v295
    %v332 = vmul.bf16 %v206, %v296
    %v333 = vmul.bf16 %v207, %v297
    %v334 = vmul.bf16 %v208, %v298
    %v335 = vmul.bf16 %v209, %v299
    %v336 = vmul.bf16 %v210, %v300
    %v337 = vmul.bf16 %v211, %v301
    %v338 = vmul.bf16 %v212, %v302
    %v339 = vmul.bf16 %v213, %v303
    %v340 = vmul.bf16 %v214, %v304
    %v341 = vmul.bf16 %v215, %v305
    %v342 = vmul.bf16 %v216, %v306
    %v343 = vmul.bf16 %v217, %v307
    %v344 = vmul.bf16 %v218, %v308
    %v345 = vmul.bf16 %v219, %v309
    %v346 = vld [vmem:[#allocation10] sm:$0xff]
    %v347 = vld [vmem:[#allocation10 + $0x8] sm:$0xff]
    %v348 = vld [vmem:[#allocation10 + $0x10] sm:$0xff]
    %v349 = vld [vmem:[#allocation10 + $0x18] sm:$0xff]
    %v350 = vld [vmem:[#allocation10 + $0x20] sm:$0xff]
    %v351 = vld [vmem:[#allocation10 + $0x28] sm:$0xff]
    %v352 = vld [vmem:[#allocation10 + $0x30] sm:$0xff]
    %v353 = vld [vmem:[#allocation10 + $0x38] sm:$0xff]
    %v354 = vld [vmem:[#allocation10 + $0x40] sm:$0xff]
    %v355 = vld [vmem:[#allocation10 + $0x48] sm:$0xff]
    %v356 = vld [vmem:[#allocation10 + $0x50] sm:$0xff]
    %v357 = vld [vmem:[#allocation10 + $0x58] sm:$0xff]
    %v358 = vld [vmem:[#allocation10 + $0x60] sm:$0xff]
    %v359 = vld [vmem:[#allocation10 + $0x68] sm:$0xff]
    %v360 = vld [vmem:[#allocation10 + $0x70] sm:$0xff]
    %v361 = vld [vmem:[#allocation10 + $0x78] sm:$0xff]
    %v362 = vld [vmem:[#allocation10 + $0x80] sm:$0xff]
    %v363 = vld [vmem:[#allocation10 + $0x88] sm:$0xff]
    %v364 = vld [vmem:[#allocation10 + $0x90] sm:$0xff]
    %v365 = vld [vmem:[#allocation10 + $0x98] sm:$0xff]
    %v366 = vld [vmem:[#allocation10 + $0xa0] sm:$0xff]
    %v367 = vld [vmem:[#allocation10 + $0xa8] sm:$0xff]
    %v368 = vld [vmem:[#allocation10 + $0xb0] sm:$0xff]
    %v369 = vld [vmem:[#allocation10 + $0xb8] sm:$0xff]
    %v370 = vld [vmem:[#allocation10 + $0xc0] sm:$0xff]
    %v371 = vld [vmem:[#allocation10 + $0xc8] sm:$0xff]
    %v372 = vld [vmem:[#allocation10 + $0xd0] sm:$0xff]
    %v373 = vld [vmem:[#allocation10 + $0xd8] sm:$0xff]
    %v374 = vld [vmem:[#allocation10 + $0xe0] sm:$0xff]
    %v375 = vld [vmem:[#allocation10 + $0xe8] sm:$0xff]
    %v376 = vld [vmem:[#allocation10 + $0xf0] sm:$0xff]
    %v377 = vld [vmem:[#allocation10 + $0xf8] sm:$0xff]
    %v378 = vld [vmem:[#allocation10 + $0x100] sm:$0xff]
    %v379 = vld [vmem:[#allocation10 + $0x108] sm:$0xff]
    %v380 = vld [vmem:[#allocation10 + $0x110] sm:$0xff]
    %v381 = vld [vmem:[#allocation10 + $0x118] sm:$0xff]
    %v382 = vld [vmem:[#allocation10 + $0x120] sm:$0xff]
    %v383 = vld [vmem:[#allocation10 + $0x128] sm:$0xff]
    %v384 = vld [vmem:[#allocation10 + $0x130] sm:$0xff]
    %v385 = vld [vmem:[#allocation10 + $0x138] sm:$0xff]
    %v386 = vld [vmem:[#allocation10 + $0x140] sm:$0xff]
    %v387 = vld [vmem:[#allocation10 + $0x148] sm:$0xff]
    %v388 = vld [vmem:[#allocation10 + $0x150] sm:$0xff]
    %v389 = vld [vmem:[#allocation10 + $0x158] sm:$0xff]
    %v390 = vld [vmem:[#allocation10 + $0x160] sm:$0xff]
    %v391 = vld [vmem:[#allocation10 + $0x168] sm:$0xff]
    %v392 = vld [vmem:[#allocation10 + $0x170] sm:$0xff]
    %v393 = vld [vmem:[#allocation10 + $0x178] sm:$0xff]
    %v394 = vld [vmem:[#allocation10 + $0x180] sm:$0xff]
    %v395 = vld [vmem:[#allocation10 + $0x188] sm:$0xff]
    %v396 = vld [vmem:[#allocation10 + $0x190] sm:$0xff]
    %v397 = vld [vmem:[#allocation10 + $0x198] sm:$0xff]
    %v398 = vld [vmem:[#allocation10 + $0x1a0] sm:$0xff]
    %v399 = vld [vmem:[#allocation10 + $0x1a8] sm:$0xff]
    %v400 = vld [vmem:[#allocation10 + $0x1b0] sm:$0xff]
    %v401 = vld [vmem:[#allocation10 + $0x1b8] sm:$0xff]
    %v402 = vld [vmem:[#allocation10 + $0x1c0] sm:$0xff]
    %v403 = vld [vmem:[#allocation10 + $0x1c8] sm:$0xff]
    %v404 = vld [vmem:[#allocation10 + $0x1d0] sm:$0xff]
    %v405 = vld [vmem:[#allocation10 + $0x1d8] sm:$0xff]
    %v406 = vld [vmem:[#allocation10 + $0x1e0] sm:$0xff]
    %v407 = vld [vmem:[#allocation10 + $0x1e8] sm:$0xff]
    %v408 = vld [vmem:[#allocation10 + $0x1f0] sm:$0xff]
    %v409 = vld [vmem:[#allocation10 + $0x1f8] sm:$0xff]
    %v410 = vld [vmem:[#allocation10 + $0x200] sm:$0xff]
    %v411 = vld [vmem:[#allocation10 + $0x208] sm:$0xff]
    %v412 = vld [vmem:[#allocation10 + $0x210] sm:$0xff]
    %v413 = vld [vmem:[#allocation10 + $0x218] sm:$0xff]
    %v414 = vld [vmem:[#allocation10 + $0x220] sm:$0xff]
    %v415 = vld [vmem:[#allocation10 + $0x228] sm:$0xff]
    %v416 = vld [vmem:[#allocation10 + $0x230] sm:$0xff]
    %v417 = vld [vmem:[#allocation10 + $0x238] sm:$0xff]
    %v418 = vld [vmem:[#allocation10 + $0x240] sm:$0xff]
    %v419 = vld [vmem:[#allocation10 + $0x248] sm:$0xff]
    %v420 = vld [vmem:[#allocation10 + $0x250] sm:$0xff]
    %v421 = vld [vmem:[#allocation10 + $0x258] sm:$0xff]
    %v422 = vld [vmem:[#allocation10 + $0x260] sm:$0xff]
    %v423 = vld [vmem:[#allocation10 + $0x268] sm:$0xff]
    %v424 = vld [vmem:[#allocation10 + $0x270] sm:$0xff]
    %v425 = vld [vmem:[#allocation10 + $0x278] sm:$0xff]
    %v426 = vld [vmem:[#allocation10 + $0x280] sm:$0xff]
    %v427 = vld [vmem:[#allocation10 + $0x288] sm:$0xff]
    %v428 = vld [vmem:[#allocation10 + $0x290] sm:$0xff]
    %v429 = vld [vmem:[#allocation10 + $0x298] sm:$0xff]
    %v430 = vld [vmem:[#allocation10 + $0x2a0] sm:$0xff]
    %v431 = vld [vmem:[#allocation10 + $0x2a8] sm:$0xff]
    %v432 = vld [vmem:[#allocation10 + $0x2b0] sm:$0xff]
    %v433 = vld [vmem:[#allocation10 + $0x2b8] sm:$0xff]
    %v434 = vld [vmem:[#allocation10 + $0x2c0] sm:$0xff]
    %v435 = vld [vmem:[#allocation10 + $0x2c8] sm:$0xff]
    %v436 = vld [vmem:[#allocation10 + $0x2d0] sm:$0xff]
    %v437 = vld [vmem:[#allocation10 + $0x2d8] sm:$0xff]
    %v438 = vld [vmem:[#allocation10 + $0x2e0] sm:$0xff]
    %v439 = vld [vmem:[#allocation10 + $0x2e8] sm:$0xff]
    %v440 = vld [vmem:[#allocation10 + $0x2f0] sm:$0xff]
    %v441 = vld [vmem:[#allocation10 + $0x2f8] sm:$0xff]
    %v442 = vld [vmem:[#allocation10 + $0x300] sm:$0xff]
    %v443 = vld [vmem:[#allocation10 + $0x308] sm:$0xff]
    %v444 = vld [vmem:[#allocation10 + $0x310] sm:$0xff]
    %v445 = vld [vmem:[#allocation10 + $0x318] sm:$0xff]
    %v446 = vld [vmem:[#allocation10 + $0x320] sm:$0xff]
    %v447 = vld [vmem:[#allocation10 + $0x328] sm:$0xff]
    %v448 = vld [vmem:[#allocation10 + $0x330] sm:$0xff]
    %v449 = vld [vmem:[#allocation10 + $0x338] sm:$0xff]
    %v450 = vld [vmem:[#allocation10 + $0x340] sm:$0xff]
    %v451 = vld [vmem:[#allocation10 + $0x348] sm:$0xff]
    %v452 = vld [vmem:[#allocation10 + $0x350] sm:$0xff]
    %v453 = vld [vmem:[#allocation10 + $0x358] sm:$0xff]
    %v454 = vld [vmem:[#allocation10 + $0x360] sm:$0xff]
    %v455 = vld [vmem:[#allocation10 + $0x368] sm:$0xff]
    %v456 = vld [vmem:[#allocation10 + $0x370] sm:$0xff]
    %v457 = vld [vmem:[#allocation10 + $0x378] sm:$0xff]
    %v458 = vld [vmem:[#allocation10 + $0x380] sm:$0xff]
    %v459 = vld [vmem:[#allocation10 + $0x388] sm:$0xff]
    %v460 = vld [vmem:[#allocation10 + $0x390] sm:$0xff]
    %v461 = vld [vmem:[#allocation10 + $0x398] sm:$0xff]
    %v462 = vld [vmem:[#allocation10 + $0x3a0] sm:$0xff]
    %v463 = vld [vmem:[#allocation10 + $0x3a8] sm:$0xff]
    %v464 = vld [vmem:[#allocation10 + $0x3b0] sm:$0xff]
    %v465 = vld [vmem:[#allocation10 + $0x3b8] sm:$0xff]
    %v466 = vld [vmem:[#allocation10 + $0x3c0] sm:$0xff]
    %v467 = vld [vmem:[#allocation10 + $0x3c8] sm:$0xff]
    %v468 = vld [vmem:[#allocation10 + $0x3d0] sm:$0xff]
    %v469 = vld [vmem:[#allocation10 + $0x3d8] sm:$0xff]
    %v470 = vld [vmem:[#allocation10 + $0x3e0] sm:$0xff]
    %v471 = vld [vmem:[#allocation10 + $0x3e8] sm:$0xff]
    %v472 = vld [vmem:[#allocation10 + $0x3f0] sm:$0xff]
    %v473 = vld [vmem:[#allocation10 + $0x3f8] sm:$0xff]
    %v474 = vld [vmem:[#allocation10 + $0x400] sm:$0xff]
    %v475 = vld [vmem:[#allocation10 + $0x408] sm:$0xff]
    %v476 = vld [vmem:[#allocation10 + $0x410] sm:$0xff]
    %v477 = vld [vmem:[#allocation10 + $0x418] sm:$0xff]
    %v478 = vld [vmem:[#allocation10 + $0x420] sm:$0xff]
    %v479 = vld [vmem:[#allocation10 + $0x428] sm:$0xff]
    %v480 = vld [vmem:[#allocation10 + $0x430] sm:$0xff]
    %v481 = vld [vmem:[#allocation10 + $0x438] sm:$0xff]
    %v482 = vld [vmem:[#allocation10 + $0x440] sm:$0xff]
    %v483 = vld [vmem:[#allocation10 + $0x448] sm:$0xff]
    %v484 = vld [vmem:[#allocation10 + $0x450] sm:$0xff]
    %v485 = vld [vmem:[#allocation10 + $0x458] sm:$0xff]
    %v486 = vld [vmem:[#allocation10 + $0x460] sm:$0xff]
    %v487 = vld [vmem:[#allocation10 + $0x468] sm:$0xff]
    %v488 = vld [vmem:[#allocation10 + $0x470] sm:$0xff]
    %v489 = vld [vmem:[#allocation10 + $0x478] sm:$0xff]
    %v490 = vld [vmem:[#allocation10 + $0x480] sm:$0xff]
    %v491 = vld [vmem:[#allocation10 + $0x488] sm:$0xff]
    %v492 = vld [vmem:[#allocation10 + $0x490] sm:$0xff]
    %v493 = vld [vmem:[#allocation10 + $0x498] sm:$0xff]
    %v494 = vld [vmem:[#allocation10 + $0x4a0] sm:$0xff]
    %v495 = vld [vmem:[#allocation10 + $0x4a8] sm:$0xff]
    %v496 = vld [vmem:[#allocation10 + $0x4b0] sm:$0xff]
    %v497 = vld [vmem:[#allocation10 + $0x4b8] sm:$0xff]
    %v498 = vld [vmem:[#allocation10 + $0x4c0] sm:$0xff]
    %v499 = vld [vmem:[#allocation10 + $0x4c8] sm:$0xff]
    %v500 = vld [vmem:[#allocation10 + $0x4d0] sm:$0xff]
    %v501 = vld [vmem:[#allocation10 + $0x4d8] sm:$0xff]
    %v502 = vld [vmem:[#allocation10 + $0x4e0] sm:$0xff]
    %v503 = vld [vmem:[#allocation10 + $0x4e8] sm:$0xff]
    %v504 = vld [vmem:[#allocation10 + $0x4f0] sm:$0xff]
    %v505 = vld [vmem:[#allocation10 + $0x4f8] sm:$0xff]
    %v506 = vld [vmem:[#allocation10 + $0x500] sm:$0xff]
    %v507 = vld [vmem:[#allocation10 + $0x508] sm:$0xff]
    %v508 = vld [vmem:[#allocation10 + $0x510] sm:$0xff]
    %v509 = vld [vmem:[#allocation10 + $0x518] sm:$0xff]
    %v510 = vld [vmem:[#allocation10 + $0x520] sm:$0xff]
    %v511 = vld [vmem:[#allocation10 + $0x528] sm:$0xff]
    %v512 = vld [vmem:[#allocation10 + $0x530] sm:$0xff]
    %v513 = vld [vmem:[#allocation10 + $0x538] sm:$0xff]
    %v514 = vld [vmem:[#allocation10 + $0x540] sm:$0xff]
    %v515 = vld [vmem:[#allocation10 + $0x548] sm:$0xff]
    %v516 = vld [vmem:[#allocation10 + $0x550] sm:$0xff]
    %v517 = vld [vmem:[#allocation10 + $0x558] sm:$0xff]
    %v518 = vld [vmem:[#allocation10 + $0x560] sm:$0xff]
    %v519 = vld [vmem:[#allocation10 + $0x568] sm:$0xff]
    %v520 = vld [vmem:[#allocation10 + $0x570] sm:$0xff]
    %v521 = vld [vmem:[#allocation10 + $0x578] sm:$0xff]
    %v522 = vld [vmem:[#allocation10 + $0x580] sm:$0xff]
    %v523 = vld [vmem:[#allocation10 + $0x588] sm:$0xff]
    %v524 = vld [vmem:[#allocation10 + $0x590] sm:$0xff]
    %v525 = vld [vmem:[#allocation10 + $0x598] sm:$0xff]
    %v526 = vld [vmem:[#allocation10 + $0x5a0] sm:$0xff]
    %v527 = vld [vmem:[#allocation10 + $0x5a8] sm:$0xff]
    %v528 = vld [vmem:[#allocation10 + $0x5b0] sm:$0xff]
    %v529 = vld [vmem:[#allocation10 + $0x5b8] sm:$0xff]
    %v530 = vld [vmem:[#allocation10 + $0x5c0] sm:$0xff]
    %v531 = vld [vmem:[#allocation10 + $0x5c8] sm:$0xff]
    %v532 = vld [vmem:[#allocation10 + $0x5d0] sm:$0xff]
    %v533 = vld [vmem:[#allocation10 + $0x5d8] sm:$0xff]
    %v534 = vld [vmem:[#allocation10 + $0x5e0] sm:$0xff]
    %v535 = vld [vmem:[#allocation10 + $0x5e8] sm:$0xff]
    %v536 = vld [vmem:[#allocation10 + $0x5f0] sm:$0xff]
    %v537 = vld [vmem:[#allocation10 + $0x5f8] sm:$0xff]
    %v538 = vld [vmem:[#allocation10 + $0x600] sm:$0xff]
    %v539 = vld [vmem:[#allocation10 + $0x608] sm:$0xff]
    %v540 = vld [vmem:[#allocation10 + $0x610] sm:$0xff]
    %v541 = vld [vmem:[#allocation10 + $0x618] sm:$0xff]
    %v542 = vld [vmem:[#allocation10 + $0x620] sm:$0xff]
    %v543 = vld [vmem:[#allocation10 + $0x628] sm:$0xff]
    %v544 = vld [vmem:[#allocation10 + $0x630] sm:$0xff]
    %v545 = vld [vmem:[#allocation10 + $0x638] sm:$0xff]
    %v546 = vld [vmem:[#allocation10 + $0x640] sm:$0xff]
    %v547 = vld [vmem:[#allocation10 + $0x648] sm:$0xff]
    %v548 = vld [vmem:[#allocation10 + $0x650] sm:$0xff]
    %v549 = vld [vmem:[#allocation10 + $0x658] sm:$0xff]
    %v550 = vld [vmem:[#allocation10 + $0x660] sm:$0xff]
    %v551 = vld [vmem:[#allocation10 + $0x668] sm:$0xff]
    %v552 = vld [vmem:[#allocation10 + $0x670] sm:$0xff]
    %v553 = vld [vmem:[#allocation10 + $0x678] sm:$0xff]
    %v554 = vld [vmem:[#allocation10 + $0x680] sm:$0xff]
    %v555 = vld [vmem:[#allocation10 + $0x688] sm:$0xff]
    %v556 = vld [vmem:[#allocation10 + $0x690] sm:$0xff]
    %v557 = vld [vmem:[#allocation10 + $0x698] sm:$0xff]
    %v558 = vld [vmem:[#allocation10 + $0x6a0] sm:$0xff]
    %v559 = vld [vmem:[#allocation10 + $0x6a8] sm:$0xff]
    %v560 = vld [vmem:[#allocation10 + $0x6b0] sm:$0xff]
    %v561 = vld [vmem:[#allocation10 + $0x6b8] sm:$0xff]
    %v562 = vld [vmem:[#allocation10 + $0x6c0] sm:$0xff]
    %v563 = vld [vmem:[#allocation10 + $0x6c8] sm:$0xff]
    %v564 = vld [vmem:[#allocation10 + $0x6d0] sm:$0xff]
    %v565 = vld [vmem:[#allocation10 + $0x6d8] sm:$0xff]
    %v566 = vld [vmem:[#allocation10 + $0x6e0] sm:$0xff]
    %v567 = vld [vmem:[#allocation10 + $0x6e8] sm:$0xff]
    %v568 = vld [vmem:[#allocation10 + $0x6f0] sm:$0xff]
    %v569 = vld [vmem:[#allocation10 + $0x6f8] sm:$0xff]
    %v570 = vld [vmem:[#allocation10 + $0x700] sm:$0xff]
    %v571 = vld [vmem:[#allocation10 + $0x708] sm:$0xff]
    %v572 = vld [vmem:[#allocation10 + $0x710] sm:$0xff]
    %v573 = vld [vmem:[#allocation10 + $0x718] sm:$0xff]
    %v574 = vld [vmem:[#allocation10 + $0x720] sm:$0xff]
    %v575 = vld [vmem:[#allocation10 + $0x728] sm:$0xff]
    %v576 = vld [vmem:[#allocation10 + $0x730] sm:$0xff]
    %v577 = vld [vmem:[#allocation10 + $0x738] sm:$0xff]
    %v578 = vld [vmem:[#allocation10 + $0x740] sm:$0xff]
    %v579 = vld [vmem:[#allocation10 + $0x748] sm:$0xff]
    %v580 = vld [vmem:[#allocation10 + $0x750] sm:$0xff]
    %v581 = vld [vmem:[#allocation10 + $0x758] sm:$0xff]
    %v582 = vld [vmem:[#allocation10 + $0x760] sm:$0xff]
    %v583 = vld [vmem:[#allocation10 + $0x768] sm:$0xff]
    %v584 = vld [vmem:[#allocation10 + $0x770] sm:$0xff]
    %v585 = vld [vmem:[#allocation10 + $0x778] sm:$0xff]
    %v586 = vld [vmem:[#allocation10 + $0x780] sm:$0xff]
    %v587 = vld [vmem:[#allocation10 + $0x788] sm:$0xff]
    %v588 = vld [vmem:[#allocation10 + $0x790] sm:$0xff]
    %v589 = vld [vmem:[#allocation10 + $0x798] sm:$0xff]
    %v590 = vld [vmem:[#allocation10 + $0x7a0] sm:$0xff]
    %v591 = vld [vmem:[#allocation10 + $0x7a8] sm:$0xff]
    %v592 = vld [vmem:[#allocation10 + $0x7b0] sm:$0xff]
    %v593 = vld [vmem:[#allocation10 + $0x7b8] sm:$0xff]
    %v594 = vld [vmem:[#allocation10 + $0x7c0] sm:$0xff]
    %v595 = vld [vmem:[#allocation10 + $0x7c8] sm:$0xff]
    %v596 = vld [vmem:[#allocation10 + $0x7d0] sm:$0xff]
    %v597 = vld [vmem:[#allocation10 + $0x7d8] sm:$0xff]
    %v598 = vld [vmem:[#allocation10 + $0x7e0] sm:$0xff]
    %v599 = vld [vmem:[#allocation10 + $0x7e8] sm:$0xff]
    %v600 = vld [vmem:[#allocation10 + $0x7f0] sm:$0xff]
    %v601 = vld [vmem:[#allocation10 + $0x7f8] sm:$0xff]
    %v602 = vld [vmem:[#allocation10 + $0x800] sm:$0xff]
    %v603 = vld [vmem:[#allocation10 + $0x808] sm:$0xff]
    %v604 = vld [vmem:[#allocation10 + $0x810] sm:$0xff]
    %v605 = vld [vmem:[#allocation10 + $0x818] sm:$0xff]
    %v606 = vld [vmem:[#allocation10 + $0x820] sm:$0xff]
    %v607 = vld [vmem:[#allocation10 + $0x828] sm:$0xff]
    %v608 = vld [vmem:[#allocation10 + $0x830] sm:$0xff]
    %v609 = vld [vmem:[#allocation10 + $0x838] sm:$0xff]
    %v610 = vld [vmem:[#allocation10 + $0x840] sm:$0xff]
    %v611 = vld [vmem:[#allocation10 + $0x848] sm:$0xff]
    %v612 = vld [vmem:[#allocation10 + $0x850] sm:$0xff]
    %v613 = vld [vmem:[#allocation10 + $0x858] sm:$0xff]
    %v614 = vld [vmem:[#allocation10 + $0x860] sm:$0xff]
    %v615 = vld [vmem:[#allocation10 + $0x868] sm:$0xff]
    %v616 = vld [vmem:[#allocation10 + $0x870] sm:$0xff]
    %v617 = vld [vmem:[#allocation10 + $0x878] sm:$0xff]
    %v618 = vld [vmem:[#allocation10 + $0x880] sm:$0xff]
    %v619 = vld [vmem:[#allocation10 + $0x888] sm:$0xff]
    %v620 = vld [vmem:[#allocation10 + $0x890] sm:$0xff]
    %v621 = vld [vmem:[#allocation10 + $0x898] sm:$0xff]
    %v622 = vld [vmem:[#allocation10 + $0x8a0] sm:$0xff]
    %v623 = vld [vmem:[#allocation10 + $0x8a8] sm:$0xff]
    %v624 = vld [vmem:[#allocation10 + $0x8b0] sm:$0xff]
    %v625 = vld [vmem:[#allocation10 + $0x8b8] sm:$0xff]
    %v626 = vld [vmem:[#allocation10 + $0x8c0] sm:$0xff]
    %v627 = vld [vmem:[#allocation10 + $0x8c8] sm:$0xff]
    %v628 = vld [vmem:[#allocation10 + $0x8d0] sm:$0xff]
    %v629 = vld [vmem:[#allocation10 + $0x8d8] sm:$0xff]
    %v630 = vld [vmem:[#allocation10 + $0x8e0] sm:$0xff]
    %v631 = vld [vmem:[#allocation10 + $0x8e8] sm:$0xff]
    %v632 = vld [vmem:[#allocation10 + $0x8f0] sm:$0xff]
    %v633 = vld [vmem:[#allocation10 + $0x8f8] sm:$0xff]
    %v634 = vld [vmem:[#allocation11] sm:$0x3]
    %v636 = vlaneseq
    %v637 = vshrl.u32 %v636, 7
    %v638 = vsub.s32 0, %v637
    %v639 = vrot.slane %v634, %v638
    %v640 = vlaneseq
    %v641 = vshrl.u32 %v640, 7
    %v642 = vsub.s32 1, %v641
    %v643 = vrot.slane %v634, %v642
    %v934 = vunpack.c.l.b16 %v346
    %v935 = vunpack.c.h.b16 %v346
    %v936 = vunpack.c.l.b16 %v347
    %v937 = vunpack.c.h.b16 %v347
    %v938 = vunpack.c.l.b16 %v348
    %v939 = vunpack.c.h.b16 %v348
    %v940 = vunpack.c.l.b16 %v349
    %v941 = vunpack.c.h.b16 %v349
    %v942 = vunpack.c.l.b16 %v350
    %v943 = vunpack.c.h.b16 %v350
    %v944 = vunpack.c.l.b16 %v351
    %v945 = vunpack.c.h.b16 %v351
    %v946 = vunpack.c.l.b16 %v352
    %v947 = vunpack.c.h.b16 %v352
    %v948 = vunpack.c.l.b16 %v353
    %v949 = vunpack.c.h.b16 %v353
    %v950 = vunpack.c.l.b16 %v354
    %v951 = vunpack.c.h.b16 %v354
    %v952 = vunpack.c.l.b16 %v355
    %v953 = vunpack.c.h.b16 %v355
    %v954 = vunpack.c.l.b16 %v356
    %v955 = vunpack.c.h.b16 %v356
    %v956 = vunpack.c.l.b16 %v357
    %v957 = vunpack.c.h.b16 %v357
    %v958 = vunpack.c.l.b16 %v358
    %v959 = vunpack.c.h.b16 %v358
    %v960 = vunpack.c.l.b16 %v359
    %v961 = vunpack.c.h.b16 %v359
    %v962 = vunpack.c.l.b16 %v360
    %v963 = vunpack.c.h.b16 %v360
    %v964 = vunpack.c.l.b16 %v361
    %v965 = vunpack.c.h.b16 %v361
    %v966 = vunpack.c.l.b16 %v362
    %v967 = vunpack.c.h.b16 %v362
    %v968 = vunpack.c.l.b16 %v363
    %v969 = vunpack.c.h.b16 %v363
    %v970 = vunpack.c.l.b16 %v364
    %v971 = vunpack.c.h.b16 %v364
    %v972 = vunpack.c.l.b16 %v365
    %v973 = vunpack.c.h.b16 %v365
    %v974 = vunpack.c.l.b16 %v366
    %v975 = vunpack.c.h.b16 %v366
    %v976 = vunpack.c.l.b16 %v367
    %v977 = vunpack.c.h.b16 %v367
    %v978 = vunpack.c.l.b16 %v368
    %v979 = vunpack.c.h.b16 %v368
    %v980 = vunpack.c.l.b16 %v369
    %v981 = vunpack.c.h.b16 %v369
    %v982 = vunpack.c.l.b16 %v370
    %v983 = vunpack.c.h.b16 %v370
    %v984 = vunpack.c.l.b16 %v371
    %v985 = vunpack.c.h.b16 %v371
    %v986 = vunpack.c.l.b16 %v372
    %v987 = vunpack.c.h.b16 %v372
    %v988 = vunpack.c.l.b16 %v373
    %v989 = vunpack.c.h.b16 %v373
    %v990 = vunpack.c.l.b16 %v374
    %v991 = vunpack.c.h.b16 %v374
    %v992 = vunpack.c.l.b16 %v375
    %v993 = vunpack.c.h.b16 %v375
    %v994 = vunpack.c.l.b16 %v376
    %v995 = vunpack.c.h.b16 %v376
    %v996 = vunpack.c.l.b16 %v377
    %v997 = vunpack.c.h.b16 %v377
    %v998 = vunpack.c.l.b16 %v378
    %v999 = vunpack.c.h.b16 %v378
    %v1000 = vunpack.c.l.b16 %v379
    %v1001 = vunpack.c.h.b16 %v379
    %v1002 = vunpack.c.l.b16 %v380
    %v1003 = vunpack.c.h.b16 %v380
    %v1004 = vunpack.c.l.b16 %v381
    %v1005 = vunpack.c.h.b16 %v381
    %v1006 = vunpack.c.l.b16 %v382
    %v1007 = vunpack.c.h.b16 %v382
    %v1008 = vunpack.c.l.b16 %v383
    %v1009 = vunpack.c.h.b16 %v383
    %v1010 = vunpack.c.l.b16 %v384
    %v1011 = vunpack.c.h.b16 %v384
    %v1012 = vunpack.c.l.b16 %v385
    %v1013 = vunpack.c.h.b16 %v385
    %v1014 = vunpack.c.l.b16 %v386
    %v1015 = vunpack.c.h.b16 %v386
    %v1016 = vunpack.c.l.b16 %v387
    %v1017 = vunpack.c.h.b16 %v387
    %v1018 = vunpack.c.l.b16 %v388
    %v1019 = vunpack.c.h.b16 %v388
    %v1020 = vunpack.c.l.b16 %v389
    %v1021 = vunpack.c.h.b16 %v389
    %v1022 = vunpack.c.l.b16 %v390
    %v1023 = vunpack.c.h.b16 %v390
    %v1024 = vunpack.c.l.b16 %v391
    %v1025 = vunpack.c.h.b16 %v391
    %v1026 = vunpack.c.l.b16 %v392
    %v1027 = vunpack.c.h.b16 %v392
    %v1028 = vunpack.c.l.b16 %v393
    %v1029 = vunpack.c.h.b16 %v393
    %v1030 = vunpack.c.l.b16 %v394
    %v1031 = vunpack.c.h.b16 %v394
    %v1032 = vunpack.c.l.b16 %v395
    %v1033 = vunpack.c.h.b16 %v395
    %v1034 = vunpack.c.l.b16 %v396
    %v1035 = vunpack.c.h.b16 %v396
    %v1036 = vunpack.c.l.b16 %v397
    %v1037 = vunpack.c.h.b16 %v397
    %v1038 = vunpack.c.l.b16 %v398
    %v1039 = vunpack.c.h.b16 %v398
    %v1040 = vunpack.c.l.b16 %v399
    %v1041 = vunpack.c.h.b16 %v399
    %v1042 = vunpack.c.l.b16 %v400
    %v1043 = vunpack.c.h.b16 %v400
    %v1044 = vunpack.c.l.b16 %v401
    %v1045 = vunpack.c.h.b16 %v401
    %v1046 = vunpack.c.l.b16 %v402
    %v1047 = vunpack.c.h.b16 %v402
    %v1048 = vunpack.c.l.b16 %v403
    %v1049 = vunpack.c.h.b16 %v403
    %v1050 = vunpack.c.l.b16 %v404
    %v1051 = vunpack.c.h.b16 %v404
    %v1052 = vunpack.c.l.b16 %v405
    %v1053 = vunpack.c.h.b16 %v405
    %v1054 = vunpack.c.l.b16 %v406
    %v1055 = vunpack.c.h.b16 %v406
    %v1056 = vunpack.c.l.b16 %v407
    %v1057 = vunpack.c.h.b16 %v407
    %v1058 = vunpack.c.l.b16 %v408
    %v1059 = vunpack.c.h.b16 %v408
    %v1060 = vunpack.c.l.b16 %v409
    %v1061 = vunpack.c.h.b16 %v409
    %v1062 = vunpack.c.l.b16 %v410
    %v1063 = vunpack.c.h.b16 %v410
    %v1064 = vunpack.c.l.b16 %v411
    %v1065 = vunpack.c.h.b16 %v411
    %v1066 = vunpack.c.l.b16 %v412
    %v1067 = vunpack.c.h.b16 %v412
    %v1068 = vunpack.c.l.b16 %v413
    %v1069 = vunpack.c.h.b16 %v413
    %v1070 = vunpack.c.l.b16 %v414
    %v1071 = vunpack.c.h.b16 %v414
    %v1072 = vunpack.c.l.b16 %v415
    %v1073 = vunpack.c.h.b16 %v415
    %v1074 = vunpack.c.l.b16 %v416
    %v1075 = vunpack.c.h.b16 %v416
    %v1076 = vunpack.c.l.b16 %v417
    %v1077 = vunpack.c.h.b16 %v417
    %v1078 = vunpack.c.l.b16 %v418
    %v1079 = vunpack.c.h.b16 %v418
    %v1080 = vunpack.c.l.b16 %v419
    %v1081 = vunpack.c.h.b16 %v419
    %v1082 = vunpack.c.l.b16 %v420
    %v1083 = vunpack.c.h.b16 %v420
    %v1084 = vunpack.c.l.b16 %v421
    %v1085 = vunpack.c.h.b16 %v421
    %v1086 = vunpack.c.l.b16 %v422
    %v1087 = vunpack.c.h.b16 %v422
    %v1088 = vunpack.c.l.b16 %v423
    %v1089 = vunpack.c.h.b16 %v423
    %v1090 = vunpack.c.l.b16 %v424
    %v1091 = vunpack.c.h.b16 %v424
    %v1092 = vunpack.c.l.b16 %v425
    %v1093 = vunpack.c.h.b16 %v425
    %v1094 = vunpack.c.l.b16 %v426
    %v1095 = vunpack.c.h.b16 %v426
    %v1096 = vunpack.c.l.b16 %v427
    %v1097 = vunpack.c.h.b16 %v427
    %v1098 = vunpack.c.l.b16 %v428
    %v1099 = vunpack.c.h.b16 %v428
    %v1100 = vunpack.c.l.b16 %v429
    %v1101 = vunpack.c.h.b16 %v429
    %v1102 = vunpack.c.l.b16 %v430
    %v1103 = vunpack.c.h.b16 %v430
    %v1104 = vunpack.c.l.b16 %v431
    %v1105 = vunpack.c.h.b16 %v431
    %v1106 = vunpack.c.l.b16 %v432
    %v1107 = vunpack.c.h.b16 %v432
    %v1108 = vunpack.c.l.b16 %v433
    %v1109 = vunpack.c.h.b16 %v433
    %v1110 = vunpack.c.l.b16 %v434
    %v1111 = vunpack.c.h.b16 %v434
    %v1112 = vunpack.c.l.b16 %v435
    %v1113 = vunpack.c.h.b16 %v435
    %v1114 = vunpack.c.l.b16 %v436
    %v1115 = vunpack.c.h.b16 %v436
    %v1116 = vunpack.c.l.b16 %v437
    %v1117 = vunpack.c.h.b16 %v437
    %v1118 = vunpack.c.l.b16 %v438
    %v1119 = vunpack.c.h.b16 %v438
    %v1120 = vunpack.c.l.b16 %v439
    %v1121 = vunpack.c.h.b16 %v439
    %v1122 = vunpack.c.l.b16 %v440
    %v1123 = vunpack.c.h.b16 %v440
    %v1124 = vunpack.c.l.b16 %v441
    %v1125 = vunpack.c.h.b16 %v441
    %v1126 = vunpack.c.l.b16 %v442
    %v1127 = vunpack.c.h.b16 %v442
    %v1128 = vunpack.c.l.b16 %v443
    %v1129 = vunpack.c.h.b16 %v443
    %v1130 = vunpack.c.l.b16 %v444
    %v1131 = vunpack.c.h.b16 %v444
    %v1132 = vunpack.c.l.b16 %v445
    %v1133 = vunpack.c.h.b16 %v445
    %v1134 = vunpack.c.l.b16 %v446
    %v1135 = vunpack.c.h.b16 %v446
    %v1136 = vunpack.c.l.b16 %v447
    %v1137 = vunpack.c.h.b16 %v447
    %v1138 = vunpack.c.l.b16 %v448
    %v1139 = vunpack.c.h.b16 %v448
    %v1140 = vunpack.c.l.b16 %v449
    %v1141 = vunpack.c.h.b16 %v449
    %v1142 = vunpack.c.l.b16 %v450
    %v1143 = vunpack.c.h.b16 %v450
    %v1144 = vunpack.c.l.b16 %v451
    %v1145 = vunpack.c.h.b16 %v451
    %v1146 = vunpack.c.l.b16 %v452
    %v1147 = vunpack.c.h.b16 %v452
    %v1148 = vunpack.c.l.b16 %v453
    %v1149 = vunpack.c.h.b16 %v453
    %v1150 = vunpack.c.l.b16 %v454
    %v1151 = vunpack.c.h.b16 %v454
    %v1152 = vunpack.c.l.b16 %v455
    %v1153 = vunpack.c.h.b16 %v455
    %v1154 = vunpack.c.l.b16 %v456
    %v1155 = vunpack.c.h.b16 %v456
    %v1156 = vunpack.c.l.b16 %v457
    %v1157 = vunpack.c.h.b16 %v457
    %v1158 = vunpack.c.l.b16 %v458
    %v1159 = vunpack.c.h.b16 %v458
    %v1160 = vunpack.c.l.b16 %v459
    %v1161 = vunpack.c.h.b16 %v459
    %v1162 = vunpack.c.l.b16 %v460
    %v1163 = vunpack.c.h.b16 %v460
    %v1164 = vunpack.c.l.b16 %v461
    %v1165 = vunpack.c.h.b16 %v461
    %v1166 = vunpack.c.l.b16 %v462
    %v1167 = vunpack.c.h.b16 %v462
    %v1168 = vunpack.c.l.b16 %v463
    %v1169 = vunpack.c.h.b16 %v463
    %v1170 = vunpack.c.l.b16 %v464
    %v1171 = vunpack.c.h.b16 %v464
    %v1172 = vunpack.c.l.b16 %v465
    %v1173 = vunpack.c.h.b16 %v465
    %v1174 = vunpack.c.l.b16 %v466
    %v1175 = vunpack.c.h.b16 %v466
    %v1176 = vunpack.c.l.b16 %v467
    %v1177 = vunpack.c.h.b16 %v467
    %v1178 = vunpack.c.l.b16 %v468
    %v1179 = vunpack.c.h.b16 %v468
    %v1180 = vunpack.c.l.b16 %v469
    %v1181 = vunpack.c.h.b16 %v469
    %v1182 = vunpack.c.l.b16 %v470
    %v1183 = vunpack.c.h.b16 %v470
    %v1184 = vunpack.c.l.b16 %v471
    %v1185 = vunpack.c.h.b16 %v471
    %v1186 = vunpack.c.l.b16 %v472
    %v1187 = vunpack.c.h.b16 %v472
    %v1188 = vunpack.c.l.b16 %v473
    %v1189 = vunpack.c.h.b16 %v473
    %v1190 = vunpack.c.l.b16 %v474
    %v1191 = vunpack.c.h.b16 %v474
    %v1192 = vunpack.c.l.b16 %v475
    %v1193 = vunpack.c.h.b16 %v475
    %v1194 = vunpack.c.l.b16 %v476
    %v1195 = vunpack.c.h.b16 %v476
    %v1196 = vunpack.c.l.b16 %v477
    %v1197 = vunpack.c.h.b16 %v477
    %v1198 = vunpack.c.l.b16 %v478
    %v1199 = vunpack.c.h.b16 %v478
    %v1200 = vunpack.c.l.b16 %v479
    %v1201 = vunpack.c.h.b16 %v479
    %v1202 = vunpack.c.l.b16 %v480
    %v1203 = vunpack.c.h.b16 %v480
    %v1204 = vunpack.c.l.b16 %v481
    %v1205 = vunpack.c.h.b16 %v481
    %v1206 = vunpack.c.l.b16 %v482
    %v1207 = vunpack.c.h.b16 %v482
    %v1208 = vunpack.c.l.b16 %v483
    %v1209 = vunpack.c.h.b16 %v483
    %v1210 = vunpack.c.l.b16 %v484
    %v1211 = vunpack.c.h.b16 %v484
    %v1212 = vunpack.c.l.b16 %v485
    %v1213 = vunpack.c.h.b16 %v485
    %v1214 = vunpack.c.l.b16 %v486
    %v1215 = vunpack.c.h.b16 %v486
    %v1216 = vunpack.c.l.b16 %v487
    %v1217 = vunpack.c.h.b16 %v487
    %v1218 = vunpack.c.l.b16 %v488
    %v1219 = vunpack.c.h.b16 %v488
    %v1220 = vunpack.c.l.b16 %v489
    %v1221 = vunpack.c.h.b16 %v489
    %v1222 = vunpack.c.l.b16 %v490
    %v1223 = vunpack.c.h.b16 %v490
    %v1224 = vunpack.c.l.b16 %v491
    %v1225 = vunpack.c.h.b16 %v491
    %v1226 = vunpack.c.l.b16 %v492
    %v1227 = vunpack.c.h.b16 %v492
    %v1228 = vunpack.c.l.b16 %v493
    %v1229 = vunpack.c.h.b16 %v493
    %v1230 = vunpack.c.l.b16 %v494
    %v1231 = vunpack.c.h.b16 %v494
    %v1232 = vunpack.c.l.b16 %v495
    %v1233 = vunpack.c.h.b16 %v495
    %v1234 = vunpack.c.l.b16 %v496
    %v1235 = vunpack.c.h.b16 %v496
    %v1236 = vunpack.c.l.b16 %v497
    %v1237 = vunpack.c.h.b16 %v497
    %v1238 = vunpack.c.l.b16 %v498
    %v1239 = vunpack.c.h.b16 %v498
    %v1240 = vunpack.c.l.b16 %v499
    %v1241 = vunpack.c.h.b16 %v499
    %v1242 = vunpack.c.l.b16 %v500
    %v1243 = vunpack.c.h.b16 %v500
    %v1244 = vunpack.c.l.b16 %v501
    %v1245 = vunpack.c.h.b16 %v501
    %v1246 = vunpack.c.l.b16 %v502
    %v1247 = vunpack.c.h.b16 %v502
    %v1248 = vunpack.c.l.b16 %v503
    %v1249 = vunpack.c.h.b16 %v503
    %v1250 = vunpack.c.l.b16 %v504
    %v1251 = vunpack.c.h.b16 %v504
    %v1252 = vunpack.c.l.b16 %v505
    %v1253 = vunpack.c.h.b16 %v505
    %v1254 = vunpack.c.l.b16 %v506
    %v1255 = vunpack.c.h.b16 %v506
    %v1256 = vunpack.c.l.b16 %v507
    %v1257 = vunpack.c.h.b16 %v507
    %v1258 = vunpack.c.l.b16 %v508
    %v1259 = vunpack.c.h.b16 %v508
    %v1260 = vunpack.c.l.b16 %v509
    %v1261 = vunpack.c.h.b16 %v509
    %v1262 = vunpack.c.l.b16 %v510
    %v1263 = vunpack.c.h.b16 %v510
    %v1264 = vunpack.c.l.b16 %v511
    %v1265 = vunpack.c.h.b16 %v511
    %v1266 = vunpack.c.l.b16 %v512
    %v1267 = vunpack.c.h.b16 %v512
    %v1268 = vunpack.c.l.b16 %v513
    %v1269 = vunpack.c.h.b16 %v513
    %v1270 = vunpack.c.l.b16 %v514
    %v1271 = vunpack.c.h.b16 %v514
    %v1272 = vunpack.c.l.b16 %v515
    %v1273 = vunpack.c.h.b16 %v515
    %v1274 = vunpack.c.l.b16 %v516
    %v1275 = vunpack.c.h.b16 %v516
    %v1276 = vunpack.c.l.b16 %v517
    %v1277 = vunpack.c.h.b16 %v517
    %v1278 = vunpack.c.l.b16 %v518
    %v1279 = vunpack.c.h.b16 %v518
    %v1280 = vunpack.c.l.b16 %v519
    %v1281 = vunpack.c.h.b16 %v519
    %v1282 = vunpack.c.l.b16 %v520
    %v1283 = vunpack.c.h.b16 %v520
    %v1284 = vunpack.c.l.b16 %v521
    %v1285 = vunpack.c.h.b16 %v521
    %v1286 = vunpack.c.l.b16 %v522
    %v1287 = vunpack.c.h.b16 %v522
    %v1288 = vunpack.c.l.b16 %v523
    %v1289 = vunpack.c.h.b16 %v523
    %v1290 = vunpack.c.l.b16 %v524
    %v1291 = vunpack.c.h.b16 %v524
    %v1292 = vunpack.c.l.b16 %v525
    %v1293 = vunpack.c.h.b16 %v525
    %v1294 = vunpack.c.l.b16 %v526
    %v1295 = vunpack.c.h.b16 %v526
    %v1296 = vunpack.c.l.b16 %v527
    %v1297 = vunpack.c.h.b16 %v527
    %v1298 = vunpack.c.l.b16 %v528
    %v1299 = vunpack.c.h.b16 %v528
    %v1300 = vunpack.c.l.b16 %v529
    %v1301 = vunpack.c.h.b16 %v529
    %v1302 = vunpack.c.l.b16 %v530
    %v1303 = vunpack.c.h.b16 %v530
    %v1304 = vunpack.c.l.b16 %v531
    %v1305 = vunpack.c.h.b16 %v531
    %v1306 = vunpack.c.l.b16 %v532
    %v1307 = vunpack.c.h.b16 %v532
    %v1308 = vunpack.c.l.b16 %v533
    %v1309 = vunpack.c.h.b16 %v533
    %v1310 = vunpack.c.l.b16 %v534
    %v1311 = vunpack.c.h.b16 %v534
    %v1312 = vunpack.c.l.b16 %v535
    %v1313 = vunpack.c.h.b16 %v535
    %v1314 = vunpack.c.l.b16 %v536
    %v1315 = vunpack.c.h.b16 %v536
    %v1316 = vunpack.c.l.b16 %v537
    %v1317 = vunpack.c.h.b16 %v537
    %v1318 = vunpack.c.l.b16 %v538
    %v1319 = vunpack.c.h.b16 %v538
    %v1320 = vunpack.c.l.b16 %v539
    %v1321 = vunpack.c.h.b16 %v539
    %v1322 = vunpack.c.l.b16 %v540
    %v1323 = vunpack.c.h.b16 %v540
    %v1324 = vunpack.c.l.b16 %v541
    %v1325 = vunpack.c.h.b16 %v541
    %v1326 = vunpack.c.l.b16 %v542
    %v1327 = vunpack.c.h.b16 %v542
    %v1328 = vunpack.c.l.b16 %v543
    %v1329 = vunpack.c.h.b16 %v543
    %v1330 = vunpack.c.l.b16 %v544
    %v1331 = vunpack.c.h.b16 %v544
    %v1332 = vunpack.c.l.b16 %v545
    %v1333 = vunpack.c.h.b16 %v545
    %v1334 = vunpack.c.l.b16 %v546
    %v1335 = vunpack.c.h.b16 %v546
    %v1336 = vunpack.c.l.b16 %v547
    %v1337 = vunpack.c.h.b16 %v547
    %v1338 = vunpack.c.l.b16 %v548
    %v1339 = vunpack.c.h.b16 %v548
    %v1340 = vunpack.c.l.b16 %v549
    %v1341 = vunpack.c.h.b16 %v549
    %v1342 = vunpack.c.l.b16 %v550
    %v1343 = vunpack.c.h.b16 %v550
    %v1344 = vunpack.c.l.b16 %v551
    %v1345 = vunpack.c.h.b16 %v551
    %v1346 = vunpack.c.l.b16 %v552
    %v1347 = vunpack.c.h.b16 %v552
    %v1348 = vunpack.c.l.b16 %v553
    %v1349 = vunpack.c.h.b16 %v553
    %v1350 = vunpack.c.l.b16 %v554
    %v1351 = vunpack.c.h.b16 %v554
    %v1352 = vunpack.c.l.b16 %v555
    %v1353 = vunpack.c.h.b16 %v555
    %v1354 = vunpack.c.l.b16 %v556
    %v1355 = vunpack.c.h.b16 %v556
    %v1356 = vunpack.c.l.b16 %v557
    %v1357 = vunpack.c.h.b16 %v557
    %v1358 = vunpack.c.l.b16 %v558
    %v1359 = vunpack.c.h.b16 %v558
    %v1360 = vunpack.c.l.b16 %v559
    %v1361 = vunpack.c.h.b16 %v559
    %v1362 = vunpack.c.l.b16 %v560
    %v1363 = vunpack.c.h.b16 %v560
    %v1364 = vunpack.c.l.b16 %v561
    %v1365 = vunpack.c.h.b16 %v561
    %v1366 = vunpack.c.l.b16 %v562
    %v1367 = vunpack.c.h.b16 %v562
    %v1368 = vunpack.c.l.b16 %v563
    %v1369 = vunpack.c.h.b16 %v563
    %v1370 = vunpack.c.l.b16 %v564
    %v1371 = vunpack.c.h.b16 %v564
    %v1372 = vunpack.c.l.b16 %v565
    %v1373 = vunpack.c.h.b16 %v565
    %v1374 = vunpack.c.l.b16 %v566
    %v1375 = vunpack.c.h.b16 %v566
    %v1376 = vunpack.c.l.b16 %v567
    %v1377 = vunpack.c.h.b16 %v567
    %v1378 = vunpack.c.l.b16 %v568
    %v1379 = vunpack.c.h.b16 %v568
    %v1380 = vunpack.c.l.b16 %v569
    %v1381 = vunpack.c.h.b16 %v569
    %v1382 = vunpack.c.l.b16 %v570
    %v1383 = vunpack.c.h.b16 %v570
    %v1384 = vunpack.c.l.b16 %v571
    %v1385 = vunpack.c.h.b16 %v571
    %v1386 = vunpack.c.l.b16 %v572
    %v1387 = vunpack.c.h.b16 %v572
    %v1388 = vunpack.c.l.b16 %v573
    %v1389 = vunpack.c.h.b16 %v573
    %v1390 = vunpack.c.l.b16 %v574
    %v1391 = vunpack.c.h.b16 %v574
    %v1392 = vunpack.c.l.b16 %v575
    %v1393 = vunpack.c.h.b16 %v575
    %v1394 = vunpack.c.l.b16 %v576
    %v1395 = vunpack.c.h.b16 %v576
    %v1396 = vunpack.c.l.b16 %v577
    %v1397 = vunpack.c.h.b16 %v577
    %v1398 = vunpack.c.l.b16 %v578
    %v1399 = vunpack.c.h.b16 %v578
    %v1400 = vunpack.c.l.b16 %v579
    %v1401 = vunpack.c.h.b16 %v579
    %v1402 = vunpack.c.l.b16 %v580
    %v1403 = vunpack.c.h.b16 %v580
    %v1404 = vunpack.c.l.b16 %v581
    %v1405 = vunpack.c.h.b16 %v581
    %v1406 = vunpack.c.l.b16 %v582
    %v1407 = vunpack.c.h.b16 %v582
    %v1408 = vunpack.c.l.b16 %v583
    %v1409 = vunpack.c.h.b16 %v583
    %v1410 = vunpack.c.l.b16 %v584
    %v1411 = vunpack.c.h.b16 %v584
    %v1412 = vunpack.c.l.b16 %v585
    %v1413 = vunpack.c.h.b16 %v585
    %v1414 = vunpack.c.l.b16 %v586
    %v1415 = vunpack.c.h.b16 %v586
    %v1416 = vunpack.c.l.b16 %v587
    %v1417 = vunpack.c.h.b16 %v587
    %v1418 = vunpack.c.l.b16 %v588
    %v1419 = vunpack.c.h.b16 %v588
    %v1420 = vunpack.c.l.b16 %v589
    %v1421 = vunpack.c.h.b16 %v589
    %v1422 = vunpack.c.l.b16 %v590
    %v1423 = vunpack.c.h.b16 %v590
    %v1424 = vunpack.c.l.b16 %v591
    %v1425 = vunpack.c.h.b16 %v591
    %v1426 = vunpack.c.l.b16 %v592
    %v1427 = vunpack.c.h.b16 %v592
    %v1428 = vunpack.c.l.b16 %v593
    %v1429 = vunpack.c.h.b16 %v593
    %v1430 = vunpack.c.l.b16 %v594
    %v1431 = vunpack.c.h.b16 %v594
    %v1432 = vunpack.c.l.b16 %v595
    %v1433 = vunpack.c.h.b16 %v595
    %v1434 = vunpack.c.l.b16 %v596
    %v1435 = vunpack.c.h.b16 %v596
    %v1436 = vunpack.c.l.b16 %v597
    %v1437 = vunpack.c.h.b16 %v597
    %v1438 = vunpack.c.l.b16 %v598
    %v1439 = vunpack.c.h.b16 %v598
    %v1440 = vunpack.c.l.b16 %v599
    %v1441 = vunpack.c.h.b16 %v599
    %v1442 = vunpack.c.l.b16 %v600
    %v1443 = vunpack.c.h.b16 %v600
    %v1444 = vunpack.c.l.b16 %v601
    %v1445 = vunpack.c.h.b16 %v601
    %v1446 = vunpack.c.l.b16 %v602
    %v1447 = vunpack.c.h.b16 %v602
    %v1448 = vunpack.c.l.b16 %v603
    %v1449 = vunpack.c.h.b16 %v603
    %v1450 = vunpack.c.l.b16 %v604
    %v1451 = vunpack.c.h.b16 %v604
    %v1452 = vunpack.c.l.b16 %v605
    %v1453 = vunpack.c.h.b16 %v605
    %v1454 = vunpack.c.l.b16 %v606
    %v1455 = vunpack.c.h.b16 %v606
    %v1456 = vunpack.c.l.b16 %v607
    %v1457 = vunpack.c.h.b16 %v607
    %v1458 = vunpack.c.l.b16 %v608
    %v1459 = vunpack.c.h.b16 %v608
    %v1460 = vunpack.c.l.b16 %v609
    %v1461 = vunpack.c.h.b16 %v609
    %v1462 = vunpack.c.l.b16 %v610
    %v1463 = vunpack.c.h.b16 %v610
    %v1464 = vunpack.c.l.b16 %v611
    %v1465 = vunpack.c.h.b16 %v611
    %v1466 = vunpack.c.l.b16 %v612
    %v1467 = vunpack.c.h.b16 %v612
    %v1468 = vunpack.c.l.b16 %v613
    %v1469 = vunpack.c.h.b16 %v613
    %v1470 = vunpack.c.l.b16 %v614
    %v1471 = vunpack.c.h.b16 %v614
    %v1472 = vunpack.c.l.b16 %v615
    %v1473 = vunpack.c.h.b16 %v615
    %v1474 = vunpack.c.l.b16 %v616
    %v1475 = vunpack.c.h.b16 %v616
    %v1476 = vunpack.c.l.b16 %v617
    %v1477 = vunpack.c.h.b16 %v617
    %v1478 = vunpack.c.l.b16 %v618
    %v1479 = vunpack.c.h.b16 %v618
    %v1480 = vunpack.c.l.b16 %v619
    %v1481 = vunpack.c.h.b16 %v619
    %v1482 = vunpack.c.l.b16 %v620
    %v1483 = vunpack.c.h.b16 %v620
    %v1484 = vunpack.c.l.b16 %v621
    %v1485 = vunpack.c.h.b16 %v621
    %v1486 = vunpack.c.l.b16 %v622
    %v1487 = vunpack.c.h.b16 %v622
    %v1488 = vunpack.c.l.b16 %v623
    %v1489 = vunpack.c.h.b16 %v623
    %v1490 = vunpack.c.l.b16 %v624
    %v1491 = vunpack.c.h.b16 %v624
    %v1492 = vunpack.c.l.b16 %v625
    %v1493 = vunpack.c.h.b16 %v625
    %v1494 = vunpack.c.l.b16 %v626
    %v1495 = vunpack.c.h.b16 %v626
    %v1496 = vunpack.c.l.b16 %v627
    %v1497 = vunpack.c.h.b16 %v627
    %v1498 = vunpack.c.l.b16 %v628
    %v1499 = vunpack.c.h.b16 %v628
    %v1500 = vunpack.c.l.b16 %v629
    %v1501 = vunpack.c.h.b16 %v629
    %v1502 = vunpack.c.l.b16 %v630
    %v1503 = vunpack.c.h.b16 %v630
    %v1504 = vunpack.c.l.b16 %v631
    %v1505 = vunpack.c.h.b16 %v631
    %v1506 = vunpack.c.l.b16 %v632
    %v1507 = vunpack.c.h.b16 %v632
    %v1508 = vunpack.c.l.b16 %v633
    %v1509 = vunpack.c.h.b16 %v633
    %v1510 = vpack.c.b16 %v936, %v934
    %v1511 = vpack.c.b16 %v937, %v935
    %v1512 = vpack.c.b16 %v940, %v938
    %v1513 = vpack.c.b16 %v941, %v939
    %v1514 = vpack.c.b16 %v944, %v942
    %v1515 = vpack.c.b16 %v945, %v943
    %v1516 = vpack.c.b16 %v948, %v946
    %v1517 = vpack.c.b16 %v949, %v947
    %v1518 = vpack.c.b16 %v952, %v950
    %v1519 = vpack.c.b16 %v953, %v951
    %v1520 = vpack.c.b16 %v956, %v954
    %v1521 = vpack.c.b16 %v957, %v955
    %v1522 = vpack.c.b16 %v960, %v958
    %v1523 = vpack.c.b16 %v961, %v959
    %v1524 = vpack.c.b16 %v964, %v962
    %v1525 = vpack.c.b16 %v965, %v963
    %v1526 = vpack.c.b16 %v968, %v966
    %v1527 = vpack.c.b16 %v969, %v967
    %v1528 = vpack.c.b16 %v972, %v970
    %v1529 = vpack.c.b16 %v973, %v971
    %v1530 = vpack.c.b16 %v976, %v974
    %v1531 = vpack.c.b16 %v977, %v975
    %v1532 = vpack.c.b16 %v980, %v978
    %v1533 = vpack.c.b16 %v981, %v979
    %v1534 = vpack.c.b16 %v984, %v982
    %v1535 = vpack.c.b16 %v985, %v983
    %v1536 = vpack.c.b16 %v988, %v986
    %v1537 = vpack.c.b16 %v989, %v987
    %v1538 = vpack.c.b16 %v992, %v990
    %v1539 = vpack.c.b16 %v993, %v991
    %v1540 = vpack.c.b16 %v996, %v994
    %v1541 = vpack.c.b16 %v997, %v995
    %v1542 = vpack.c.b16 %v1000, %v998
    %v1543 = vpack.c.b16 %v1001, %v999
    %v1544 = vpack.c.b16 %v1004, %v1002
    %v1545 = vpack.c.b16 %v1005, %v1003
    %v1546 = vpack.c.b16 %v1008, %v1006
    %v1547 = vpack.c.b16 %v1009, %v1007
    %v1548 = vpack.c.b16 %v1012, %v1010
    %v1549 = vpack.c.b16 %v1013, %v1011
    %v1550 = vpack.c.b16 %v1016, %v1014
    %v1551 = vpack.c.b16 %v1017, %v1015
    %v1552 = vpack.c.b16 %v1020, %v1018
    %v1553 = vpack.c.b16 %v1021, %v1019
    %v1554 = vpack.c.b16 %v1024, %v1022
    %v1555 = vpack.c.b16 %v1025, %v1023
    %v1556 = vpack.c.b16 %v1028, %v1026
    %v1557 = vpack.c.b16 %v1029, %v1027
    %v1558 = vpack.c.b16 %v1032, %v1030
    %v1559 = vpack.c.b16 %v1033, %v1031
    %v1560 = vpack.c.b16 %v1036, %v1034
    %v1561 = vpack.c.b16 %v1037, %v1035
    %v1562 = vpack.c.b16 %v1040, %v1038
    %v1563 = vpack.c.b16 %v1041, %v1039
    %v1564 = vpack.c.b16 %v1044, %v1042
    %v1565 = vpack.c.b16 %v1045, %v1043
    %v1566 = vpack.c.b16 %v1048, %v1046
    %v1567 = vpack.c.b16 %v1049, %v1047
    %v1568 = vpack.c.b16 %v1052, %v1050
    %v1569 = vpack.c.b16 %v1053, %v1051
    %v1570 = vpack.c.b16 %v1056, %v1054
    %v1571 = vpack.c.b16 %v1057, %v1055
    %v1572 = vpack.c.b16 %v1060, %v1058
    %v1573 = vpack.c.b16 %v1061, %v1059
    %v1574 = vpack.c.b16 %v1064, %v1062
    %v1575 = vpack.c.b16 %v1065, %v1063
    %v1576 = vpack.c.b16 %v1068, %v1066
    %v1577 = vpack.c.b16 %v1069, %v1067
    %v1578 = vpack.c.b16 %v1072, %v1070
    %v1579 = vpack.c.b16 %v1073, %v1071
    %v1580 = vpack.c.b16 %v1076, %v1074
    %v1581 = vpack.c.b16 %v1077, %v1075
    %v1582 = vpack.c.b16 %v1080, %v1078
    %v1583 = vpack.c.b16 %v1081, %v1079
    %v1584 = vpack.c.b16 %v1084, %v1082
    %v1585 = vpack.c.b16 %v1085, %v1083
    %v1586 = vpack.c.b16 %v1088, %v1086
    %v1587 = vpack.c.b16 %v1089, %v1087
    %v1588 = vpack.c.b16 %v1092, %v1090
    %v1589 = vpack.c.b16 %v1093, %v1091
    %v1590 = vpack.c.b16 %v1096, %v1094
    %v1591 = vpack.c.b16 %v1097, %v1095
    %v1592 = vpack.c.b16 %v1100, %v1098
    %v1593 = vpack.c.b16 %v1101, %v1099
    %v1594 = vpack.c.b16 %v1104, %v1102
    %v1595 = vpack.c.b16 %v1105, %v1103
    %v1596 = vpack.c.b16 %v1108, %v1106
    %v1597 = vpack.c.b16 %v1109, %v1107
    %v1598 = vpack.c.b16 %v1112, %v1110
    %v1599 = vpack.c.b16 %v1113, %v1111
    %v1600 = vpack.c.b16 %v1116, %v1114
    %v1601 = vpack.c.b16 %v1117, %v1115
    %v1602 = vpack.c.b16 %v1120, %v1118
    %v1603 = vpack.c.b16 %v1121, %v1119
    %v1604 = vpack.c.b16 %v1124, %v1122
    %v1605 = vpack.c.b16 %v1125, %v1123
    %v1606 = vpack.c.b16 %v1128, %v1126
    %v1607 = vpack.c.b16 %v1129, %v1127
    %v1608 = vpack.c.b16 %v1132, %v1130
    %v1609 = vpack.c.b16 %v1133, %v1131
    %v1610 = vpack.c.b16 %v1136, %v1134
    %v1611 = vpack.c.b16 %v1137, %v1135
    %v1612 = vpack.c.b16 %v1140, %v1138
    %v1613 = vpack.c.b16 %v1141, %v1139
    %v1614 = vpack.c.b16 %v1144, %v1142
    %v1615 = vpack.c.b16 %v1145, %v1143
    %v1616 = vpack.c.b16 %v1148, %v1146
    %v1617 = vpack.c.b16 %v1149, %v1147
    %v1618 = vpack.c.b16 %v1152, %v1150
    %v1619 = vpack.c.b16 %v1153, %v1151
    %v1620 = vpack.c.b16 %v1156, %v1154
    %v1621 = vpack.c.b16 %v1157, %v1155
    %v1622 = vpack.c.b16 %v1160, %v1158
    %v1623 = vpack.c.b16 %v1161, %v1159
    %v1624 = vpack.c.b16 %v1164, %v1162
    %v1625 = vpack.c.b16 %v1165, %v1163
    %v1626 = vpack.c.b16 %v1168, %v1166
    %v1627 = vpack.c.b16 %v1169, %v1167
    %v1628 = vpack.c.b16 %v1172, %v1170
    %v1629 = vpack.c.b16 %v1173, %v1171
    %v1630 = vpack.c.b16 %v1176, %v1174
    %v1631 = vpack.c.b16 %v1177, %v1175
    %v1632 = vpack.c.b16 %v1180, %v1178
    %v1633 = vpack.c.b16 %v1181, %v1179
    %v1634 = vpack.c.b16 %v1184, %v1182
    %v1635 = vpack.c.b16 %v1185, %v1183
    %v1636 = vpack.c.b16 %v1188, %v1186
    %v1637 = vpack.c.b16 %v1189, %v1187
    %v1638 = vpack.c.b16 %v1192, %v1190
    %v1639 = vpack.c.b16 %v1193, %v1191
    %v1640 = vpack.c.b16 %v1196, %v1194
    %v1641 = vpack.c.b16 %v1197, %v1195
    %v1642 = vpack.c.b16 %v1200, %v1198
    %v1643 = vpack.c.b16 %v1201, %v1199
    %v1644 = vpack.c.b16 %v1204, %v1202
    %v1645 = vpack.c.b16 %v1205, %v1203
    %v1646 = vpack.c.b16 %v1208, %v1206
    %v1647 = vpack.c.b16 %v1209, %v1207
    %v1648 = vpack.c.b16 %v1212, %v1210
    %v1649 = vpack.c.b16 %v1213, %v1211
    %v1650 = vpack.c.b16 %v1216, %v1214
    %v1651 = vpack.c.b16 %v1217, %v1215
    %v1652 = vpack.c.b16 %v1220, %v1218
    %v1653 = vpack.c.b16 %v1221, %v1219
    %v1654 = vpack.c.b16 %v1224, %v1222
    %v1655 = vpack.c.b16 %v1225, %v1223
    %v1656 = vpack.c.b16 %v1228, %v1226
    %v1657 = vpack.c.b16 %v1229, %v1227
    %v1658 = vpack.c.b16 %v1232, %v1230
    %v1659 = vpack.c.b16 %v1233, %v1231
    %v1660 = vpack.c.b16 %v1236, %v1234
    %v1661 = vpack.c.b16 %v1237, %v1235
    %v1662 = vpack.c.b16 %v1240, %v1238
    %v1663 = vpack.c.b16 %v1241, %v1239
    %v1664 = vpack.c.b16 %v1244, %v1242
    %v1665 = vpack.c.b16 %v1245, %v1243
    %v1666 = vpack.c.b16 %v1248, %v1246
    %v1667 = vpack.c.b16 %v1249, %v1247
    %v1668 = vpack.c.b16 %v1252, %v1250
    %v1669 = vpack.c.b16 %v1253, %v1251
    %v1670 = vpack.c.b16 %v1256, %v1254
    %v1671 = vpack.c.b16 %v1257, %v1255
    %v1672 = vpack.c.b16 %v1260, %v1258
    %v1673 = vpack.c.b16 %v1261, %v1259
    %v1674 = vpack.c.b16 %v1264, %v1262
    %v1675 = vpack.c.b16 %v1265, %v1263
    %v1676 = vpack.c.b16 %v1268, %v1266
    %v1677 = vpack.c.b16 %v1269, %v1267
    %v1678 = vpack.c.b16 %v1272, %v1270
    %v1679 = vpack.c.b16 %v1273, %v1271
    %v1680 = vpack.c.b16 %v1276, %v1274
    %v1681 = vpack.c.b16 %v1277, %v1275
    %v1682 = vpack.c.b16 %v1280, %v1278
    %v1683 = vpack.c.b16 %v1281, %v1279
    %v1684 = vpack.c.b16 %v1284, %v1282
    %v1685 = vpack.c.b16 %v1285, %v1283
    %v1686 = vpack.c.b16 %v1288, %v1286
    %v1687 = vpack.c.b16 %v1289, %v1287
    %v1688 = vpack.c.b16 %v1292, %v1290
    %v1689 = vpack.c.b16 %v1293, %v1291
    %v1690 = vpack.c.b16 %v1296, %v1294
    %v1691 = vpack.c.b16 %v1297, %v1295
    %v1692 = vpack.c.b16 %v1300, %v1298
    %v1693 = vpack.c.b16 %v1301, %v1299
    %v1694 = vpack.c.b16 %v1304, %v1302
    %v1695 = vpack.c.b16 %v1305, %v1303
    %v1696 = vpack.c.b16 %v1308, %v1306
    %v1697 = vpack.c.b16 %v1309, %v1307
    %v1698 = vpack.c.b16 %v1312, %v1310
    %v1699 = vpack.c.b16 %v1313, %v1311
    %v1700 = vpack.c.b16 %v1316, %v1314
    %v1701 = vpack.c.b16 %v1317, %v1315
    %v1702 = vpack.c.b16 %v1320, %v1318
    %v1703 = vpack.c.b16 %v1321, %v1319
    %v1704 = vpack.c.b16 %v1324, %v1322
    %v1705 = vpack.c.b16 %v1325, %v1323
    %v1706 = vpack.c.b16 %v1328, %v1326
    %v1707 = vpack.c.b16 %v1329, %v1327
    %v1708 = vpack.c.b16 %v1332, %v1330
    %v1709 = vpack.c.b16 %v1333, %v1331
    %v1710 = vpack.c.b16 %v1336, %v1334
    %v1711 = vpack.c.b16 %v1337, %v1335
    %v1712 = vpack.c.b16 %v1340, %v1338
    %v1713 = vpack.c.b16 %v1341, %v1339
    %v1714 = vpack.c.b16 %v1344, %v1342
    %v1715 = vpack.c.b16 %v1345, %v1343
    %v1716 = vpack.c.b16 %v1348, %v1346
    %v1717 = vpack.c.b16 %v1349, %v1347
    %v1718 = vpack.c.b16 %v1352, %v1350
    %v1719 = vpack.c.b16 %v1353, %v1351
    %v1720 = vpack.c.b16 %v1356, %v1354
    %v1721 = vpack.c.b16 %v1357, %v1355
    %v1722 = vpack.c.b16 %v1360, %v1358
    %v1723 = vpack.c.b16 %v1361, %v1359
    %v1724 = vpack.c.b16 %v1364, %v1362
    %v1725 = vpack.c.b16 %v1365, %v1363
    %v1726 = vpack.c.b16 %v1368, %v1366
    %v1727 = vpack.c.b16 %v1369, %v1367
    %v1728 = vpack.c.b16 %v1372, %v1370
    %v1729 = vpack.c.b16 %v1373, %v1371
    %v1730 = vpack.c.b16 %v1376, %v1374
    %v1731 = vpack.c.b16 %v1377, %v1375
    %v1732 = vpack.c.b16 %v1380, %v1378
    %v1733 = vpack.c.b16 %v1381, %v1379
    %v1734 = vpack.c.b16 %v1384, %v1382
    %v1735 = vpack.c.b16 %v1385, %v1383
    %v1736 = vpack.c.b16 %v1388, %v1386
    %v1737 = vpack.c.b16 %v1389, %v1387
    %v1738 = vpack.c.b16 %v1392, %v1390
    %v1739 = vpack.c.b16 %v1393, %v1391
    %v1740 = vpack.c.b16 %v1396, %v1394
    %v1741 = vpack.c.b16 %v1397, %v1395
    %v1742 = vpack.c.b16 %v1400, %v1398
    %v1743 = vpack.c.b16 %v1401, %v1399
    %v1744 = vpack.c.b16 %v1404, %v1402
    %v1745 = vpack.c.b16 %v1405, %v1403
    %v1746 = vpack.c.b16 %v1408, %v1406
    %v1747 = vpack.c.b16 %v1409, %v1407
    %v1748 = vpack.c.b16 %v1412, %v1410
    %v1749 = vpack.c.b16 %v1413, %v1411
    %v1750 = vpack.c.b16 %v1416, %v1414
    %v1751 = vpack.c.b16 %v1417, %v1415
    %v1752 = vpack.c.b16 %v1420, %v1418
    %v1753 = vpack.c.b16 %v1421, %v1419
    %v1754 = vpack.c.b16 %v1424, %v1422
    %v1755 = vpack.c.b16 %v1425, %v1423
    %v1756 = vpack.c.b16 %v1428, %v1426
    %v1757 = vpack.c.b16 %v1429, %v1427
    %v1758 = vpack.c.b16 %v1432, %v1430
    %v1759 = vpack.c.b16 %v1433, %v1431
    %v1760 = vpack.c.b16 %v1436, %v1434
    %v1761 = vpack.c.b16 %v1437, %v1435
    %v1762 = vpack.c.b16 %v1440, %v1438
    %v1763 = vpack.c.b16 %v1441, %v1439
    %v1764 = vpack.c.b16 %v1444, %v1442
    %v1765 = vpack.c.b16 %v1445, %v1443
    %v1766 = vpack.c.b16 %v1448, %v1446
    %v1767 = vpack.c.b16 %v1449, %v1447
    %v1768 = vpack.c.b16 %v1452, %v1450
    %v1769 = vpack.c.b16 %v1453, %v1451
    %v1770 = vpack.c.b16 %v1456, %v1454
    %v1771 = vpack.c.b16 %v1457, %v1455
    %v1772 = vpack.c.b16 %v1460, %v1458
    %v1773 = vpack.c.b16 %v1461, %v1459
    %v1774 = vpack.c.b16 %v1464, %v1462
    %v1775 = vpack.c.b16 %v1465, %v1463
    %v1776 = vpack.c.b16 %v1468, %v1466
    %v1777 = vpack.c.b16 %v1469, %v1467
    %v1778 = vpack.c.b16 %v1472, %v1470
    %v1779 = vpack.c.b16 %v1473, %v1471
    %v1780 = vpack.c.b16 %v1476, %v1474
    %v1781 = vpack.c.b16 %v1477, %v1475
    %v1782 = vpack.c.b16 %v1480, %v1478
    %v1783 = vpack.c.b16 %v1481, %v1479
    %v1784 = vpack.c.b16 %v1484, %v1482
    %v1785 = vpack.c.b16 %v1485, %v1483
    %v1786 = vpack.c.b16 %v1488, %v1486
    %v1787 = vpack.c.b16 %v1489, %v1487
    %v1788 = vpack.c.b16 %v1492, %v1490
    %v1789 = vpack.c.b16 %v1493, %v1491
    %v1790 = vpack.c.b16 %v1496, %v1494
    %v1791 = vpack.c.b16 %v1497, %v1495
    %v1792 = vpack.c.b16 %v1500, %v1498
    %v1793 = vpack.c.b16 %v1501, %v1499
    %v1794 = vpack.c.b16 %v1504, %v1502
    %v1795 = vpack.c.b16 %v1505, %v1503
    %v1796 = vpack.c.b16 %v1508, %v1506
    %v1797 = vpack.c.b16 %v1509, %v1507
    %2086 = vmatprep.subr.bf16.mxu0 %v1511
    %2087 = vmatpush1.bf16.msra.mxu0 %v1510
    %2088 = vmatprep.subr.bf16.mxu0 %v1513
    %2089 = vmatpush1.bf16.msra.mxu0 %v1512
    %2090 = vmatprep.subr.bf16.mxu0 %v1515
    %2091 = vmatpush1.bf16.msra.mxu0 %v1514
    %2092 = vmatprep.subr.bf16.mxu0 %v1517
    %2093 = vmatpush1.bf16.msra.mxu0 %v1516
    %2094 = vmatprep.subr.bf16.mxu0 %v1519
    %2095 = vmatpush1.bf16.msra.mxu0 %v1518
    %2096 = vmatprep.subr.bf16.mxu0 %v1521
    %2097 = vmatpush1.bf16.msra.mxu0 %v1520
    %2098 = vmatprep.subr.bf16.mxu0 %v1523
    %2099 = vmatpush1.bf16.msra.mxu0 %v1522
    %2100 = vmatprep.subr.bf16.mxu0 %v1525
    %2101 = vmatpush1.bf16.msra.mxu0 %v1524
    %2102 = vmatprep.subr.bf16.mxu0 %v1527
    %2103 = vmatpush1.bf16.msra.mxu0 %v1526
    %2104 = vmatprep.subr.bf16.mxu0 %v1529
    %2105 = vmatpush1.bf16.msra.mxu0 %v1528
    %2106 = vmatprep.subr.bf16.mxu0 %v1531
    %2107 = vmatpush1.bf16.msra.mxu0 %v1530
    %2108 = vmatprep.subr.bf16.mxu0 %v1533
    %2109 = vmatpush1.bf16.msra.mxu0 %v1532
    %2110 = vmatprep.subr.bf16.mxu0 %v1535
    %2111 = vmatpush1.bf16.msra.mxu0 %v1534
    %2112 = vmatprep.subr.bf16.mxu0 %v1537
    %2113 = vmatpush1.bf16.msra.mxu0 %v1536
    %2114 = vmatprep.subr.bf16.mxu0 %v1539
    %2115 = vmatpush1.bf16.msra.mxu0 %v1538
    %2116 = vmatprep.subr.bf16.mxu0 %v1541
    %2117 = vmatpush1.bf16.msra.mxu0 %v1540
    %2118 = vmatprep.mubr.bf16.mxu0 %v329
    %2119 = vmatmul.mubr.bf16.gmra.mrb[0].mxu0 %v328
    %v2120 = vpop.f32.mrb[0].mxu0
    %v2121 = vadd.f32 %v639, %v2120
    %v2122 = vpop.f32.mrb[0].mxu0
    %v2123 = vadd.f32 %v643, %v2122
    %v2124 = vpop.f32.mrb[0].mxu0
    %v2125 = vadd.f32 %v639, %v2124
    %v2126 = vpop.f32.mrb[0].mxu0
    %v2127 = vadd.f32 %v643, %v2126
    %2128 = vdwg.mxu0
    %2129 = vmatprep.subr.bf16.mxu0 %v1543
    %2130 = vmatpush1.bf16.msra.mxu0 %v1542
    %2131 = vmatprep.subr.bf16.mxu0 %v1545
    %2132 = vmatpush1.bf16.msra.mxu0 %v1544
    %2133 = vmatprep.subr.bf16.mxu0 %v1547
    %2134 = vmatpush1.bf16.msra.mxu0 %v1546
    %2135 = vmatprep.subr.bf16.mxu0 %v1549
    %2136 = vmatpush1.bf16.msra.mxu0 %v1548
    %2137 = vmatprep.subr.bf16.mxu0 %v1551
    %2138 = vmatpush1.bf16.msra.mxu0 %v1550
    %2139 = vmatprep.subr.bf16.mxu0 %v1553
    %2140 = vmatpush1.bf16.msra.mxu0 %v1552
    %2141 = vmatprep.subr.bf16.mxu0 %v1555
    %2142 = vmatpush1.bf16.msra.mxu0 %v1554
    %2143 = vmatprep.subr.bf16.mxu0 %v1557
    %2144 = vmatpush1.bf16.msra.mxu0 %v1556
    %2145 = vmatprep.subr.bf16.mxu0 %v1559
    %2146 = vmatpush1.bf16.msra.mxu0 %v1558
    %2147 = vmatprep.subr.bf16.mxu0 %v1561
    %2148 = vmatpush1.bf16.msra.mxu0 %v1560
    %2149 = vmatprep.subr.bf16.mxu0 %v1563
    %2150 = vmatpush1.bf16.msra.mxu0 %v1562
    %2151 = vmatprep.subr.bf16.mxu0 %v1565
    %2152 = vmatpush1.bf16.msra.mxu0 %v1564
    %2153 = vmatprep.subr.bf16.mxu0 %v1567
    %2154 = vmatpush1.bf16.msra.mxu0 %v1566
    %2155 = vmatprep.subr.bf16.mxu0 %v1569
    %2156 = vmatpush1.bf16.msra.mxu0 %v1568
    %2157 = vmatprep.subr.bf16.mxu0 %v1571
    %2158 = vmatpush1.bf16.msra.mxu0 %v1570
    %2159 = vmatprep.subr.bf16.mxu0 %v1573
    %2160 = vmatpush1.bf16.msra.mxu0 %v1572
    %2161 = vmatprep.mubr.bf16.mxu0 %v331
    %2162 = vmatmul.mubr.bf16.gmra.mrb[0].mxu0 %v330
    %v2163 = vpop.f32.mrb[0].mxu0
    %v2164 = vadd.f32 %v2121, %v2163
    %v2165 = vpop.f32.mrb[0].mxu0
    %v2166 = vadd.f32 %v2123, %v2165
    %v2167 = vpop.f32.mrb[0].mxu0
    %v2168 = vadd.f32 %v2125, %v2167
    %v2169 = vpop.f32.mrb[0].mxu0
    %v2170 = vadd.f32 %v2127, %v2169
    %2171 = vdwg.mxu0
    %2172 = vmatprep.subr.bf16.mxu0 %v1575
    %2173 = vmatpush1.bf16.msra.mxu0 %v1574
    %2174 = vmatprep.subr.bf16.mxu0 %v1577
    %2175 = vmatpush1.bf16.msra.mxu0 %v1576
    %2176 = vmatprep.subr.bf16.mxu0 %v1579
    %2177 = vmatpush1.bf16.msra.mxu0 %v1578
    %2178 = vmatprep.subr.bf16.mxu0 %v1581
    %2179 = vmatpush1.bf16.msra.mxu0 %v1580
    %2180 = vmatprep.subr.bf16.mxu0 %v1583
    %2181 = vmatpush1.bf16.msra.mxu0 %v1582
    %2182 = vmatprep.subr.bf16.mxu0 %v1585
    %2183 = vmatpush1.bf16.msra.mxu0 %v1584
    %2184 = vmatprep.subr.bf16.mxu0 %v1587
    %2185 = vmatpush1.bf16.msra.mxu0 %v1586
    %2186 = vmatprep.subr.bf16.mxu0 %v1589
    %2187 = vmatpush1.bf16.msra.mxu0 %v1588
    %2188 = vmatprep.subr.bf16.mxu0 %v1591
    %2189 = vmatpush1.bf16.msra.mxu0 %v1590
    %2190 = vmatprep.subr.bf16.mxu0 %v1593
    %2191 = vmatpush1.bf16.msra.mxu0 %v1592
    %2192 = vmatprep.subr.bf16.mxu0 %v1595
    %2193 = vmatpush1.bf16.msra.mxu0 %v1594
    %2194 = vmatprep.subr.bf16.mxu0 %v1597
    %2195 = vmatpush1.bf16.msra.mxu0 %v1596
    %2196 = vmatprep.subr.bf16.mxu0 %v1599
    %2197 = vmatpush1.bf16.msra.mxu0 %v1598
    %2198 = vmatprep.subr.bf16.mxu0 %v1601
    %2199 = vmatpush1.bf16.msra.mxu0 %v1600
    %2200 = vmatprep.subr.bf16.mxu0 %v1603
    %2201 = vmatpush1.bf16.msra.mxu0 %v1602
    %2202 = vmatprep.subr.bf16.mxu0 %v1605
    %2203 = vmatpush1.bf16.msra.mxu0 %v1604
    %2204 = vmatprep.mubr.bf16.mxu0 %v333
    %2205 = vmatmul.mubr.bf16.gmra.mrb[0].mxu0 %v332
    %v2206 = vpop.f32.mrb[0].mxu0
    %v2207 = vadd.f32 %v2164, %v2206
    %v2208 = vpop.f32.mrb[0].mxu0
    %v2209 = vadd.f32 %v2166, %v2208
    %v2210 = vpop.f32.mrb[0].mxu0
    %v2211 = vadd.f32 %v2168, %v2210
    %v2212 = vpop.f32.mrb[0].mxu0
    %v2213 = vadd.f32 %v2170, %v2212
    %2214 = vdwg.mxu0
    %2215 = vmatprep.subr.bf16.mxu0 %v1607
    %2216 = vmatpush1.bf16.msra.mxu0 %v1606
    %2217 = vmatprep.subr.bf16.mxu0 %v1609
    %2218 = vmatpush1.bf16.msra.mxu0 %v1608
    %2219 = vmatprep.subr.bf16.mxu0 %v1611
    %2220 = vmatpush1.bf16.msra.mxu0 %v1610
    %2221 = vmatprep.subr.bf16.mxu0 %v1613
    %2222 = vmatpush1.bf16.msra.mxu0 %v1612
    %2223 = vmatprep.subr.bf16.mxu0 %v1615
    %2224 = vmatpush1.bf16.msra.mxu0 %v1614
    %2225 = vmatprep.subr.bf16.mxu0 %v1617
    %2226 = vmatpush1.bf16.msra.mxu0 %v1616
    %2227 = vmatprep.subr.bf16.mxu0 %v1619
    %2228 = vmatpush1.bf16.msra.mxu0 %v1618
    %2229 = vmatprep.subr.bf16.mxu0 %v1621
    %2230 = vmatpush1.bf16.msra.mxu0 %v1620
    %2231 = vmatprep.subr.bf16.mxu0 %v1623
    %2232 = vmatpush1.bf16.msra.mxu0 %v1622
    %2233 = vmatprep.subr.bf16.mxu0 %v1625
    %2234 = vmatpush1.bf16.msra.mxu0 %v1624
    %2235 = vmatprep.subr.bf16.mxu0 %v1627
    %2236 = vmatpush1.bf16.msra.mxu0 %v1626
    %2237 = vmatprep.subr.bf16.mxu0 %v1629
    %2238 = vmatpush1.bf16.msra.mxu0 %v1628
    %2239 = vmatprep.subr.bf16.mxu0 %v1631
    %2240 = vmatpush1.bf16.msra.mxu0 %v1630
    %2241 = vmatprep.subr.bf16.mxu0 %v1633
    %2242 = vmatpush1.bf16.msra.mxu0 %v1632
    %2243 = vmatprep.subr.bf16.mxu0 %v1635
    %2244 = vmatpush1.bf16.msra.mxu0 %v1634
    %2245 = vmatprep.subr.bf16.mxu0 %v1637
    %2246 = vmatpush1.bf16.msra.mxu0 %v1636
    %2247 = vmatprep.mubr.bf16.mxu0 %v335
    %2248 = vmatmul.mubr.bf16.gmra.mrb[0].mxu0 %v334
    %v2249 = vpop.f32.mrb[0].mxu0
    %v2250 = vadd.f32 %v2207, %v2249
    %v2251 = vpop.f32.mrb[0].mxu0
    %v2252 = vadd.f32 %v2209, %v2251
    %v2253 = vpop.f32.mrb[0].mxu0
    %v2254 = vadd.f32 %v2211, %v2253
    %v2255 = vpop.f32.mrb[0].mxu0
    %v2256 = vadd.f32 %v2213, %v2255
    %2257 = vdwg.mxu0
    %2258 = vmatprep.subr.bf16.mxu0 %v1639
    %2259 = vmatpush1.bf16.msra.mxu0 %v1638
    %2260 = vmatprep.subr.bf16.mxu0 %v1641
    %2261 = vmatpush1.bf16.msra.mxu0 %v1640
    %2262 = vmatprep.subr.bf16.mxu0 %v1643
    %2263 = vmatpush1.bf16.msra.mxu0 %v1642
    %2264 = vmatprep.subr.bf16.mxu0 %v1645
    %2265 = vmatpush1.bf16.msra.mxu0 %v1644
    %2266 = vmatprep.subr.bf16.mxu0 %v1647
    %2267 = vmatpush1.bf16.msra.mxu0 %v1646
    %2268 = vmatprep.subr.bf16.mxu0 %v1649
    %2269 = vmatpush1.bf16.msra.mxu0 %v1648
    %2270 = vmatprep.subr.bf16.mxu0 %v1651
    %2271 = vmatpush1.bf16.msra.mxu0 %v1650
    %2272 = vmatprep.subr.bf16.mxu0 %v1653
    %2273 = vmatpush1.bf16.msra.mxu0 %v1652
    %2274 = vmatprep.subr.bf16.mxu0 %v1655
    %2275 = vmatpush1.bf16.msra.mxu0 %v1654
    %2276 = vmatprep.subr.bf16.mxu0 %v1657
    %2277 = vmatpush1.bf16.msra.mxu0 %v1656
    %2278 = vmatprep.subr.bf16.mxu0 %v1659
    %2279 = vmatpush1.bf16.msra.mxu0 %v1658
    %2280 = vmatprep.subr.bf16.mxu0 %v1661
    %2281 = vmatpush1.bf16.msra.mxu0 %v1660
    %2282 = vmatprep.subr.bf16.mxu0 %v1663
    %2283 = vmatpush1.bf16.msra.mxu0 %v1662
    %2284 = vmatprep.subr.bf16.mxu0 %v1665
    %2285 = vmatpush1.bf16.msra.mxu0 %v1664
    %2286 = vmatprep.subr.bf16.mxu0 %v1667
    %2287 = vmatpush1.bf16.msra.mxu0 %v1666
    %2288 = vmatprep.subr.bf16.mxu0 %v1669
    %2289 = vmatpush1.bf16.msra.mxu0 %v1668
    %2290 = vmatprep.mubr.bf16.mxu0 %v337
    %2291 = vmatmul.mubr.bf16.gmra.mrb[0].mxu0 %v336
    %v2292 = vpop.f32.mrb[0].mxu0
    %v2293 = vadd.f32 %v2250, %v2292
    %v2294 = vpop.f32.mrb[0].mxu0
    %v2295 = vadd.f32 %v2252, %v2294
    %v2296 = vpop.f32.mrb[0].mxu0
    %v2297 = vadd.f32 %v2254, %v2296
    %v2298 = vpop.f32.mrb[0].mxu0
    %v2299 = vadd.f32 %v2256, %v2298
    %2300 = vdwg.mxu0
    %2301 = vmatprep.subr.bf16.mxu0 %v1671
    %2302 = vmatpush1.bf16.msra.mxu0 %v1670
    %2303 = vmatprep.subr.bf16.mxu0 %v1673
    %2304 = vmatpush1.bf16.msra.mxu0 %v1672
    %2305 = vmatprep.subr.bf16.mxu0 %v1675
    %2306 = vmatpush1.bf16.msra.mxu0 %v1674
    %2307 = vmatprep.subr.bf16.mxu0 %v1677
    %2308 = vmatpush1.bf16.msra.mxu0 %v1676
    %2309 = vmatprep.subr.bf16.mxu0 %v1679
    %2310 = vmatpush1.bf16.msra.mxu0 %v1678
    %2311 = vmatprep.subr.bf16.mxu0 %v1681
    %2312 = vmatpush1.bf16.msra.mxu0 %v1680
    %2313 = vmatprep.subr.bf16.mxu0 %v1683
    %2314 = vmatpush1.bf16.msra.mxu0 %v1682
    %2315 = vmatprep.subr.bf16.mxu0 %v1685
    %2316 = vmatpush1.bf16.msra.mxu0 %v1684
    %2317 = vmatprep.subr.bf16.mxu0 %v1687
    %2318 = vmatpush1.bf16.msra.mxu0 %v1686
    %2319 = vmatprep.subr.bf16.mxu0 %v1689
    %2320 = vmatpush1.bf16.msra.mxu0 %v1688
    %2321 = vmatprep.subr.bf16.mxu0 %v1691
    %2322 = vmatpush1.bf16.msra.mxu0 %v1690
    %2323 = vmatprep.subr.bf16.mxu0 %v1693
    %2324 = vmatpush1.bf16.msra.mxu0 %v1692
    %2325 = vmatprep.subr.bf16.mxu0 %v1695
    %2326 = vmatpush1.bf16.msra.mxu0 %v1694
    %2327 = vmatprep.subr.bf16.mxu0 %v1697
    %2328 = vmatpush1.bf16.msra.mxu0 %v1696
    %2329 = vmatprep.subr.bf16.mxu0 %v1699
    %2330 = vmatpush1.bf16.msra.mxu0 %v1698
    %2331 = vmatprep.subr.bf16.mxu0 %v1701
    %2332 = vmatpush1.bf16.msra.mxu0 %v1700
    %2333 = vmatprep.mubr.bf16.mxu0 %v339
    %2334 = vmatmul.mubr.bf16.gmra.mrb[0].mxu0 %v338
    %v2335 = vpop.f32.mrb[0].mxu0
    %v2336 = vadd.f32 %v2293, %v2335
    %v2337 = vpop.f32.mrb[0].mxu0
    %v2338 = vadd.f32 %v2295, %v2337
    %v2339 = vpop.f32.mrb[0].mxu0
    %v2340 = vadd.f32 %v2297, %v2339
    %v2341 = vpop.f32.mrb[0].mxu0
    %v2342 = vadd.f32 %v2299, %v2341
    %2343 = vdwg.mxu0
    %2344 = vmatprep.subr.bf16.mxu0 %v1703
    %2345 = vmatpush1.bf16.msra.mxu0 %v1702
    %2346 = vmatprep.subr.bf16.mxu0 %v1705
    %2347 = vmatpush1.bf16.msra.mxu0 %v1704
    %2348 = vmatprep.subr.bf16.mxu0 %v1707
    %2349 = vmatpush1.bf16.msra.mxu0 %v1706
    %2350 = vmatprep.subr.bf16.mxu0 %v1709
    %2351 = vmatpush1.bf16.msra.mxu0 %v1708
    %2352 = vmatprep.subr.bf16.mxu0 %v1711
    %2353 = vmatpush1.bf16.msra.mxu0 %v1710
    %2354 = vmatprep.subr.bf16.mxu0 %v1713
    %2355 = vmatpush1.bf16.msra.mxu0 %v1712
    %2356 = vmatprep.subr.bf16.mxu0 %v1715
    %2357 = vmatpush1.bf16.msra.mxu0 %v1714
    %2358 = vmatprep.subr.bf16.mxu0 %v1717
    %2359 = vmatpush1.bf16.msra.mxu0 %v1716
    %2360 = vmatprep.subr.bf16.mxu0 %v1719
    %2361 = vmatpush1.bf16.msra.mxu0 %v1718
    %2362 = vmatprep.subr.bf16.mxu0 %v1721
    %2363 = vmatpush1.bf16.msra.mxu0 %v1720
    %2364 = vmatprep.subr.bf16.mxu0 %v1723
    %2365 = vmatpush1.bf16.msra.mxu0 %v1722
    %2366 = vmatprep.subr.bf16.mxu0 %v1725
    %2367 = vmatpush1.bf16.msra.mxu0 %v1724
    %2368 = vmatprep.subr.bf16.mxu0 %v1727
    %2369 = vmatpush1.bf16.msra.mxu0 %v1726
    %2370 = vmatprep.subr.bf16.mxu0 %v1729
    %2371 = vmatpush1.bf16.msra.mxu0 %v1728
    %2372 = vmatprep.subr.bf16.mxu0 %v1731
    %2373 = vmatpush1.bf16.msra.mxu0 %v1730
    %2374 = vmatprep.subr.bf16.mxu0 %v1733
    %2375 = vmatpush1.bf16.msra.mxu0 %v1732
    %2376 = vmatprep.mubr.bf16.mxu0 %v341
    %2377 = vmatmul.mubr.bf16.gmra.mrb[0].mxu0 %v340
    %v2378 = vpop.f32.mrb[0].mxu0
    %v2379 = vadd.f32 %v2336, %v2378
    %v2380 = vpop.f32.mrb[0].mxu0
    %v2381 = vadd.f32 %v2338, %v2380
    %v2382 = vpop.f32.mrb[0].mxu0
    %v2383 = vadd.f32 %v2340, %v2382
    %v2384 = vpop.f32.mrb[0].mxu0
    %v2385 = vadd.f32 %v2342, %v2384
    %2386 = vdwg.mxu0
    %2387 = vmatprep.subr.bf16.mxu0 %v1735
    %2388 = vmatpush1.bf16.msra.mxu0 %v1734
    %2389 = vmatprep.subr.bf16.mxu0 %v1737
    %2390 = vmatpush1.bf16.msra.mxu0 %v1736
    %2391 = vmatprep.subr.bf16.mxu0 %v1739
    %2392 = vmatpush1.bf16.msra.mxu0 %v1738
    %2393 = vmatprep.subr.bf16.mxu0 %v1741
    %2394 = vmatpush1.bf16.msra.mxu0 %v1740
    %2395 = vmatprep.subr.bf16.mxu0 %v1743
    %2396 = vmatpush1.bf16.msra.mxu0 %v1742
    %2397 = vmatprep.subr.bf16.mxu0 %v1745
    %2398 = vmatpush1.bf16.msra.mxu0 %v1744
    %2399 = vmatprep.subr.bf16.mxu0 %v1747
    %2400 = vmatpush1.bf16.msra.mxu0 %v1746
    %2401 = vmatprep.subr.bf16.mxu0 %v1749
    %2402 = vmatpush1.bf16.msra.mxu0 %v1748
    %2403 = vmatprep.subr.bf16.mxu0 %v1751
    %2404 = vmatpush1.bf16.msra.mxu0 %v1750
    %2405 = vmatprep.subr.bf16.mxu0 %v1753
    %2406 = vmatpush1.bf16.msra.mxu0 %v1752
    %2407 = vmatprep.subr.bf16.mxu0 %v1755
    %2408 = vmatpush1.bf16.msra.mxu0 %v1754
    %2409 = vmatprep.subr.bf16.mxu0 %v1757
    %2410 = vmatpush1.bf16.msra.mxu0 %v1756
    %2411 = vmatprep.subr.bf16.mxu0 %v1759
    %2412 = vmatpush1.bf16.msra.mxu0 %v1758
    %2413 = vmatprep.subr.bf16.mxu0 %v1761
    %2414 = vmatpush1.bf16.msra.mxu0 %v1760
    %2415 = vmatprep.subr.bf16.mxu0 %v1763
    %2416 = vmatpush1.bf16.msra.mxu0 %v1762
    %2417 = vmatprep.subr.bf16.mxu0 %v1765
    %2418 = vmatpush1.bf16.msra.mxu0 %v1764
    %2419 = vmatprep.mubr.bf16.mxu0 %v343
    %2420 = vmatmul.mubr.bf16.gmra.mrb[0].mxu0 %v342
    %v2421 = vpop.f32.mrb[0].mxu0
    %v2422 = vadd.f32 %v2379, %v2421
    %v2423 = vpop.f32.mrb[0].mxu0
    %v2424 = vadd.f32 %v2381, %v2423
    %v2425 = vpop.f32.mrb[0].mxu0
    %v2426 = vadd.f32 %v2383, %v2425
    %v2427 = vpop.f32.mrb[0].mxu0
    %v2428 = vadd.f32 %v2385, %v2427
    %2429 = vdwg.mxu0
    %2430 = vmatprep.subr.bf16.mxu0 %v1767
    %2431 = vmatpush1.bf16.msra.mxu0 %v1766
    %2432 = vmatprep.subr.bf16.mxu0 %v1769
    %2433 = vmatpush1.bf16.msra.mxu0 %v1768
    %2434 = vmatprep.subr.bf16.mxu0 %v1771
    %2435 = vmatpush1.bf16.msra.mxu0 %v1770
    %2436 = vmatprep.subr.bf16.mxu0 %v1773
    %2437 = vmatpush1.bf16.msra.mxu0 %v1772
    %2438 = vmatprep.subr.bf16.mxu0 %v1775
    %2439 = vmatpush1.bf16.msra.mxu0 %v1774
    %2440 = vmatprep.subr.bf16.mxu0 %v1777
    %2441 = vmatpush1.bf16.msra.mxu0 %v1776
    %2442 = vmatprep.subr.bf16.mxu0 %v1779
    %2443 = vmatpush1.bf16.msra.mxu0 %v1778
    %2444 = vmatprep.subr.bf16.mxu0 %v1781
    %2445 = vmatpush1.bf16.msra.mxu0 %v1780
    %2446 = vmatprep.subr.bf16.mxu0 %v1783
    %2447 = vmatpush1.bf16.msra.mxu0 %v1782
    %2448 = vmatprep.subr.bf16.mxu0 %v1785
    %2449 = vmatpush1.bf16.msra.mxu0 %v1784
    %2450 = vmatprep.subr.bf16.mxu0 %v1787
    %2451 = vmatpush1.bf16.msra.mxu0 %v1786
    %2452 = vmatprep.subr.bf16.mxu0 %v1789
    %2453 = vmatpush1.bf16.msra.mxu0 %v1788
    %2454 = vmatprep.subr.bf16.mxu0 %v1791
    %2455 = vmatpush1.bf16.msra.mxu0 %v1790
    %2456 = vmatprep.subr.bf16.mxu0 %v1793
    %2457 = vmatpush1.bf16.msra.mxu0 %v1792
    %2458 = vmatprep.subr.bf16.mxu0 %v1795
    %2459 = vmatpush1.bf16.msra.mxu0 %v1794
    %2460 = vmatprep.subr.bf16.mxu0 %v1797
    %2461 = vmatpush1.bf16.msra.mxu0 %v1796
    %2462 = vmatprep.mubr.bf16.mxu0 %v345
    %2463 = vmatmul.mubr.bf16.gmra.mrb[0].mxu0 %v344
    %v2464 = vpop.f32.mrb[0].mxu0
    %v2465 = vadd.f32 %v2422, %v2464
    %v2466 = vpop.f32.mrb[0].mxu0
    %v2467 = vadd.f32 %v2424, %v2466
    %v2468 = vpop.f32.mrb[0].mxu0
    %v2469 = vadd.f32 %v2426, %v2468
    %v2470 = vpop.f32.mrb[0].mxu0
    %v2471 = vadd.f32 %v2428, %v2470
    %2472 = vdwg.mxu0
    %v2473 = vmax.f32 %v2465, 0.0
    %v2474 = vmax.f32 %v2467, 0.0
    %v2475 = vmax.f32 %v2469, 0.0
    %v2476 = vmax.f32 %v2471, 0.0
    %v2477 = vpack.c.bf16 %v2475, %v2473
    %v2478 = vpack.c.bf16 %v2476, %v2474
    %v2479 = vld [vmem:[#allocation7] sm:$0xff]
    %v2480 = vld [vmem:[#allocation7 + $0x8] sm:$0xff]
    %v2483 = vunpack.c.l.b16 %v2479
    %v2484 = vunpack.c.h.b16 %v2479
    %v2485 = vunpack.c.l.b16 %v2480
    %v2486 = vunpack.c.h.b16 %v2480
    %v2487 = vpack.c.b16 %v2485, %v2483
    %v2488 = vpack.c.b16 %v2486, %v2484
    %v2491 = vmul.bf16 %v2477, %v2487
    %v2492 = vmul.bf16 %v2478, %v2488
    %v2493 = vld [vmem:[#allocation13] sm:$0xff]
    %v2494 = vld [vmem:[#allocation13 + $0x8] sm:$0xff]
    %v2495 = vld [vmem:[#allocation13 + $0x10] sm:$0xff]
    %v2496 = vld [vmem:[#allocation13 + $0x18] sm:$0xff]
    %v2497 = vld [vmem:[#allocation13 + $0x20] sm:$0xff]
    %v2498 = vld [vmem:[#allocation13 + $0x28] sm:$0xff]
    %v2499 = vld [vmem:[#allocation13 + $0x30] sm:$0xff]
    %v2500 = vld [vmem:[#allocation13 + $0x38] sm:$0xff]
    %v2501 = vld [vmem:[#allocation13 + $0x40] sm:$0xff]
    %v2502 = vld [vmem:[#allocation13 + $0x48] sm:$0xff]
    %v2503 = vld [vmem:[#allocation13 + $0x50] sm:$0xff]
    %v2504 = vld [vmem:[#allocation13 + $0x58] sm:$0xff]
    %v2505 = vld [vmem:[#allocation13 + $0x60] sm:$0xff]
    %v2506 = vld [vmem:[#allocation13 + $0x68] sm:$0xff]
    %v2507 = vld [vmem:[#allocation13 + $0x70] sm:$0xff]
    %v2508 = vld [vmem:[#allocation13 + $0x78] sm:$0xff]
    %v2509 = vld [vmem:[#allocation13 + $0x80] sm:$0xff]
    %v2510 = vld [vmem:[#allocation13 + $0x88] sm:$0xff]
    %v2511 = vld [vmem:[#allocation13 + $0x90] sm:$0xff]
    %v2512 = vld [vmem:[#allocation13 + $0x98] sm:$0xff]
    %v2513 = vld [vmem:[#allocation13 + $0xa0] sm:$0xff]
    %v2514 = vld [vmem:[#allocation13 + $0xa8] sm:$0xff]
    %v2515 = vld [vmem:[#allocation13 + $0xb0] sm:$0xff]
    %v2516 = vld [vmem:[#allocation13 + $0xb8] sm:$0xff]
    %v2517 = vld [vmem:[#allocation13 + $0xc0] sm:$0xff]
    %v2518 = vld [vmem:[#allocation13 + $0xc8] sm:$0xff]
    %v2519 = vld [vmem:[#allocation13 + $0xd0] sm:$0xff]
    %v2520 = vld [vmem:[#allocation13 + $0xd8] sm:$0xff]
    %v2521 = vld [vmem:[#allocation13 + $0xe0] sm:$0xff]
    %v2522 = vld [vmem:[#allocation13 + $0xe8] sm:$0xff]
    %v2523 = vld [vmem:[#allocation13 + $0xf0] sm:$0xff]
    %v2524 = vld [vmem:[#allocation13 + $0xf8] sm:$0xff]
    %v2525 = vld [vmem:[#allocation14] sm:$0x3]
    %v2527 = vlaneseq
    %v2528 = vshrl.u32 %v2527, 7
    %v2529 = vsub.s32 0, %v2528
    %v2530 = vrot.slane %v2525, %v2529
    %v2531 = vlaneseq
    %v2532 = vshrl.u32 %v2531, 7
    %v2533 = vsub.s32 1, %v2532
    %v2534 = vrot.slane %v2525, %v2533
    %v2569 = vunpack.c.l.b16 %v2493
    %v2570 = vunpack.c.h.b16 %v2493
    %v2571 = vunpack.c.l.b16 %v2494
    %v2572 = vunpack.c.h.b16 %v2494
    %v2573 = vunpack.c.l.b16 %v2495
    %v2574 = vunpack.c.h.b16 %v2495
    %v2575 = vunpack.c.l.b16 %v2496
    %v2576 = vunpack.c.h.b16 %v2496
    %v2577 = vunpack.c.l.b16 %v2497
    %v2578 = vunpack.c.h.b16 %v2497
    %v2579 = vunpack.c.l.b16 %v2498
    %v2580 = vunpack.c.h.b16 %v2498
    %v2581 = vunpack.c.l.b16 %v2499
    %v2582 = vunpack.c.h.b16 %v2499
    %v2583 = vunpack.c.l.b16 %v2500
    %v2584 = vunpack.c.h.b16 %v2500
    %v2585 = vunpack.c.l.b16 %v2501
    %v2586 = vunpack.c.h.b16 %v2501
    %v2587 = vunpack.c.l.b16 %v2502
    %v2588 = vunpack.c.h.b16 %v2502
    %v2589 = vunpack.c.l.b16 %v2503
    %v2590 = vunpack.c.h.b16 %v2503
    %v2591 = vunpack.c.l.b16 %v2504
    %v2592 = vunpack.c.h.b16 %v2504
    %v2593 = vunpack.c.l.b16 %v2505
    %v2594 = vunpack.c.h.b16 %v2505
    %v2595 = vunpack.c.l.b16 %v2506
    %v2596 = vunpack.c.h.b16 %v2506
    %v2597 = vunpack.c.l.b16 %v2507
    %v2598 = vunpack.c.h.b16 %v2507
    %v2599 = vunpack.c.l.b16 %v2508
    %v2600 = vunpack.c.h.b16 %v2508
    %v2601 = vunpack.c.l.b16 %v2509
    %v2602 = vunpack.c.h.b16 %v2509
    %v2603 = vunpack.c.l.b16 %v2510
    %v2604 = vunpack.c.h.b16 %v2510
    %v2605 = vunpack.c.l.b16 %v2511
    %v2606 = vunpack.c.h.b16 %v2511
    %v2607 = vunpack.c.l.b16 %v2512
    %v2608 = vunpack.c.h.b16 %v2512
    %v2609 = vunpack.c.l.b16 %v2513
    %v2610 = vunpack.c.h.b16 %v2513
    %v2611 = vunpack.c.l.b16 %v2514
    %v2612 = vunpack.c.h.b16 %v2514
    %v2613 = vunpack.c.l.b16 %v2515
    %v2614 = vunpack.c.h.b16 %v2515
    %v2615 = vunpack.c.l.b16 %v2516
    %v2616 = vunpack.c.h.b16 %v2516
    %v2617 = vunpack.c.l.b16 %v2517
    %v2618 = vunpack.c.h.b16 %v2517
    %v2619 = vunpack.c.l.b16 %v2518
    %v2620 = vunpack.c.h.b16 %v2518
    %v2621 = vunpack.c.l.b16 %v2519
    %v2622 = vunpack.c.h.b16 %v2519
    %v2623 = vunpack.c.l.b16 %v2520
    %v2624 = vunpack.c.h.b16 %v2520
    %v2625 = vunpack.c.l.b16 %v2521
    %v2626 = vunpack.c.h.b16 %v2521
    %v2627 = vunpack.c.l.b16 %v2522
    %v2628 = vunpack.c.h.b16 %v2522
    %v2629 = vunpack.c.l.b16 %v2523
    %v2630 = vunpack.c.h.b16 %v2523
    %v2631 = vunpack.c.l.b16 %v2524
    %v2632 = vunpack.c.h.b16 %v2524
    %v2633 = vpack.c.b16 %v2571, %v2569
    %v2634 = vpack.c.b16 %v2572, %v2570
    %v2635 = vpack.c.b16 %v2575, %v2573
    %v2636 = vpack.c.b16 %v2576, %v2574
    %v2637 = vpack.c.b16 %v2579, %v2577
    %v2638 = vpack.c.b16 %v2580, %v2578
    %v2639 = vpack.c.b16 %v2583, %v2581
    %v2640 = vpack.c.b16 %v2584, %v2582
    %v2641 = vpack.c.b16 %v2587, %v2585
    %v2642 = vpack.c.b16 %v2588, %v2586
    %v2643 = vpack.c.b16 %v2591, %v2589
    %v2644 = vpack.c.b16 %v2592, %v2590
    %v2645 = vpack.c.b16 %v2595, %v2593
    %v2646 = vpack.c.b16 %v2596, %v2594
    %v2647 = vpack.c.b16 %v2599, %v2597
    %v2648 = vpack.c.b16 %v2600, %v2598
    %v2649 = vpack.c.b16 %v2603, %v2601
    %v2650 = vpack.c.b16 %v2604, %v2602
    %v2651 = vpack.c.b16 %v2607, %v2605
    %v2652 = vpack.c.b16 %v2608, %v2606
    %v2653 = vpack.c.b16 %v2611, %v2609
    %v2654 = vpack.c.b16 %v2612, %v2610
    %v2655 = vpack.c.b16 %v2615, %v2613
    %v2656 = vpack.c.b16 %v2616, %v2614
    %v2657 = vpack.c.b16 %v2619, %v2617
    %v2658 = vpack.c.b16 %v2620, %v2618
    %v2659 = vpack.c.b16 %v2623, %v2621
    %v2660 = vpack.c.b16 %v2624, %v2622
    %v2661 = vpack.c.b16 %v2627, %v2625
    %v2662 = vpack.c.b16 %v2628, %v2626
    %v2663 = vpack.c.b16 %v2631, %v2629
    %v2664 = vpack.c.b16 %v2632, %v2630
    %2697 = vmatprep.subr.bf16.mxu0 %v2634
    %2698 = vmatpush1.bf16.msra.mxu0 %v2633
    %2699 = vmatprep.subr.bf16.mxu0 %v2636
    %2700 = vmatpush1.bf16.msra.mxu0 %v2635
    %2701 = vmatprep.subr.bf16.mxu0 %v2638
    %2702 = vmatpush1.bf16.msra.mxu0 %v2637
    %2703 = vmatprep.subr.bf16.mxu0 %v2640
    %2704 = vmatpush1.bf16.msra.mxu0 %v2639
    %2705 = vmatprep.subr.bf16.mxu0 %v2642
    %2706 = vmatpush1.bf16.msra.mxu0 %v2641
    %2707 = vmatprep.subr.bf16.mxu0 %v2644
    %2708 = vmatpush1.bf16.msra.mxu0 %v2643
    %2709 = vmatprep.subr.bf16.mxu0 %v2646
    %2710 = vmatpush1.bf16.msra.mxu0 %v2645
    %2711 = vmatprep.subr.bf16.mxu0 %v2648
    %2712 = vmatpush1.bf16.msra.mxu0 %v2647
    %2713 = vmatprep.subr.bf16.mxu0 %v2650
    %2714 = vmatpush1.bf16.msra.mxu0 %v2649
    %2715 = vmatprep.subr.bf16.mxu0 %v2652
    %2716 = vmatpush1.bf16.msra.mxu0 %v2651
    %2717 = vmatprep.subr.bf16.mxu0 %v2654
    %2718 = vmatpush1.bf16.msra.mxu0 %v2653
    %2719 = vmatprep.subr.bf16.mxu0 %v2656
    %2720 = vmatpush1.bf16.msra.mxu0 %v2655
    %2721 = vmatprep.subr.bf16.mxu0 %v2658
    %2722 = vmatpush1.bf16.msra.mxu0 %v2657
    %2723 = vmatprep.subr.bf16.mxu0 %v2660
    %2724 = vmatpush1.bf16.msra.mxu0 %v2659
    %2725 = vmatprep.subr.bf16.mxu0 %v2662
    %2726 = vmatpush1.bf16.msra.mxu0 %v2661
    %2727 = vmatprep.subr.bf16.mxu0 %v2664
    %2728 = vmatpush1.bf16.msra.mxu0 %v2663
    %2729 = vmatprep.mubr.bf16.mxu0 %v2492
    %2730 = vmatmul.mubr.bf16.gmra.mrb[0].mxu0 %v2491
    %v2731 = vpop.f32.mrb[0].mxu0
    %v2732 = vadd.f32 %v2530, %v2731
    %v2733 = vpop.f32.mrb[0].mxu0
    %v2734 = vadd.f32 %v2534, %v2733
    %v2735 = vpop.f32.mrb[0].mxu0
    %v2736 = vadd.f32 %v2530, %v2735
    %v2737 = vpop.f32.mrb[0].mxu0
    %v2738 = vadd.f32 %v2534, %v2737
    %2739 = vdwg.mxu0
    %v2740 = vmax.f32 %v2732, 0.0
    %v2741 = vmax.f32 %v2734, 0.0
    %v2742 = vmax.f32 %v2736, 0.0
    %v2743 = vmax.f32 %v2738, 0.0
    %v2744 = vpack.c.bf16 %v2742, %v2740
    %v2745 = vpack.c.bf16 %v2743, %v2741
    %v2746 = vld [vmem:[#allocation16] sm:$0xff]
    %v2747 = vld [vmem:[#allocation16 + $0x8] sm:$0xff]
    %v2748 = vld [vmem:[#allocation16 + $0x10] sm:$0xff]
    %v2749 = vld [vmem:[#allocation16 + $0x18] sm:$0xff]
    %v2750 = vld [vmem:[#allocation16 + $0x20] sm:$0xff]
    %v2751 = vld [vmem:[#allocation16 + $0x28] sm:$0xff]
    %v2752 = vld [vmem:[#allocation16 + $0x30] sm:$0xff]
    %v2753 = vld [vmem:[#allocation16 + $0x38] sm:$0xff]
    %v2754 = vld [vmem:[#allocation16 + $0x40] sm:$0xff]
    %v2755 = vld [vmem:[#allocation16 + $0x48] sm:$0xff]
    %v2756 = vld [vmem:[#allocation16 + $0x50] sm:$0xff]
    %v2757 = vld [vmem:[#allocation16 + $0x58] sm:$0xff]
    %v2758 = vld [vmem:[#allocation16 + $0x60] sm:$0xff]
    %v2759 = vld [vmem:[#allocation16 + $0x68] sm:$0xff]
    %v2760 = vld [vmem:[#allocation16 + $0x70] sm:$0xff]
    %v2761 = vld [vmem:[#allocation16 + $0x78] sm:$0xff]
    %v2762 = vld [vmem:[#allocation16 + $0x80] sm:$0xff]
    %v2763 = vld [vmem:[#allocation16 + $0x88] sm:$0xff]
    %v2764 = vld [vmem:[#allocation16 + $0x90] sm:$0xff]
    %v2765 = vld [vmem:[#allocation16 + $0x98] sm:$0xff]
    %v2766 = vld [vmem:[#allocation16 + $0xa0] sm:$0xff]
    %v2767 = vld [vmem:[#allocation16 + $0xa8] sm:$0xff]
    %v2768 = vld [vmem:[#allocation16 + $0xb0] sm:$0xff]
    %v2769 = vld [vmem:[#allocation16 + $0xb8] sm:$0xff]
    %v2770 = vld [vmem:[#allocation16 + $0xc0] sm:$0xff]
    %v2771 = vld [vmem:[#allocation16 + $0xc8] sm:$0xff]
    %v2772 = vld [vmem:[#allocation16 + $0xd0] sm:$0xff]
    %v2773 = vld [vmem:[#allocation16 + $0xd8] sm:$0xff]
    %v2774 = vld [vmem:[#allocation16 + $0xe0] sm:$0xff]
    %v2775 = vld [vmem:[#allocation16 + $0xe8] sm:$0xff]
    %v2776 = vld [vmem:[#allocation16 + $0xf0] sm:$0xff]
    %v2777 = vld [vmem:[#allocation16 + $0xf8] sm:$0xff]
    %v2778 = vld [vmem:[#allocation17] sm:$0x3]
    %v2780 = vlaneseq
    %v2781 = vshrl.u32 %v2780, 7
    %v2782 = vsub.s32 0, %v2781
    %v2783 = vrot.slane %v2778, %v2782
    %v2784 = vlaneseq
    %v2785 = vshrl.u32 %v2784, 7
    %v2786 = vsub.s32 1, %v2785
    %v2787 = vrot.slane %v2778, %v2786
    %v2822 = vunpack.c.l.b16 %v2746
    %v2823 = vunpack.c.h.b16 %v2746
    %v2824 = vunpack.c.l.b16 %v2747
    %v2825 = vunpack.c.h.b16 %v2747
    %v2826 = vunpack.c.l.b16 %v2748
    %v2827 = vunpack.c.h.b16 %v2748
    %v2828 = vunpack.c.l.b16 %v2749
    %v2829 = vunpack.c.h.b16 %v2749
    %v2830 = vunpack.c.l.b16 %v2750
    %v2831 = vunpack.c.h.b16 %v2750
    %v2832 = vunpack.c.l.b16 %v2751
    %v2833 = vunpack.c.h.b16 %v2751
    %v2834 = vunpack.c.l.b16 %v2752
    %v2835 = vunpack.c.h.b16 %v2752
    %v2836 = vunpack.c.l.b16 %v2753
    %v2837 = vunpack.c.h.b16 %v2753
    %v2838 = vunpack.c.l.b16 %v2754
    %v2839 = vunpack.c.h.b16 %v2754
    %v2840 = vunpack.c.l.b16 %v2755
    %v2841 = vunpack.c.h.b16 %v2755
    %v2842 = vunpack.c.l.b16 %v2756
    %v2843 = vunpack.c.h.b16 %v2756
    %v2844 = vunpack.c.l.b16 %v2757
    %v2845 = vunpack.c.h.b16 %v2757
    %v2846 = vunpack.c.l.b16 %v2758
    %v2847 = vunpack.c.h.b16 %v2758
    %v2848 = vunpack.c.l.b16 %v2759
    %v2849 = vunpack.c.h.b16 %v2759
    %v2850 = vunpack.c.l.b16 %v2760
    %v2851 = vunpack.c.h.b16 %v2760
    %v2852 = vunpack.c.l.b16 %v2761
    %v2853 = vunpack.c.h.b16 %v2761
    %v2854 = vunpack.c.l.b16 %v2762
    %v2855 = vunpack.c.h.b16 %v2762
    %v2856 = vunpack.c.l.b16 %v2763
    %v2857 = vunpack.c.h.b16 %v2763
    %v2858 = vunpack.c.l.b16 %v2764
    %v2859 = vunpack.c.h.b16 %v2764
    %v2860 = vunpack.c.l.b16 %v2765
    %v2861 = vunpack.c.h.b16 %v2765
    %v2862 = vunpack.c.l.b16 %v2766
    %v2863 = vunpack.c.h.b16 %v2766
    %v2864 = vunpack.c.l.b16 %v2767
    %v2865 = vunpack.c.h.b16 %v2767
    %v2866 = vunpack.c.l.b16 %v2768
    %v2867 = vunpack.c.h.b16 %v2768
    %v2868 = vunpack.c.l.b16 %v2769
    %v2869 = vunpack.c.h.b16 %v2769
    %v2870 = vunpack.c.l.b16 %v2770
    %v2871 = vunpack.c.h.b16 %v2770
    %v2872 = vunpack.c.l.b16 %v2771
    %v2873 = vunpack.c.h.b16 %v2771
    %v2874 = vunpack.c.l.b16 %v2772
    %v2875 = vunpack.c.h.b16 %v2772
    %v2876 = vunpack.c.l.b16 %v2773
    %v2877 = vunpack.c.h.b16 %v2773
    %v2878 = vunpack.c.l.b16 %v2774
    %v2879 = vunpack.c.h.b16 %v2774
    %v2880 = vunpack.c.l.b16 %v2775
    %v2881 = vunpack.c.h.b16 %v2775
    %v2882 = vunpack.c.l.b16 %v2776
    %v2883 = vunpack.c.h.b16 %v2776
    %v2884 = vunpack.c.l.b16 %v2777
    %v2885 = vunpack.c.h.b16 %v2777
    %v2886 = vpack.c.b16 %v2824, %v2822
    %v2887 = vpack.c.b16 %v2825, %v2823
    %v2888 = vpack.c.b16 %v2828, %v2826
    %v2889 = vpack.c.b16 %v2829, %v2827
    %v2890 = vpack.c.b16 %v2832, %v2830
    %v2891 = vpack.c.b16 %v2833, %v2831
    %v2892 = vpack.c.b16 %v2836, %v2834
    %v2893 = vpack.c.b16 %v2837, %v2835
    %v2894 = vpack.c.b16 %v2840, %v2838
    %v2895 = vpack.c.b16 %v2841, %v2839
    %v2896 = vpack.c.b16 %v2844, %v2842
    %v2897 = vpack.c.b16 %v2845, %v2843
    %v2898 = vpack.c.b16 %v2848, %v2846
    %v2899 = vpack.c.b16 %v2849, %v2847
    %v2900 = vpack.c.b16 %v2852, %v2850
    %v2901 = vpack.c.b16 %v2853, %v2851
    %v2902 = vpack.c.b16 %v2856, %v2854
    %v2903 = vpack.c.b16 %v2857, %v2855
    %v2904 = vpack.c.b16 %v2860, %v2858
    %v2905 = vpack.c.b16 %v2861, %v2859
    %v2906 = vpack.c.b16 %v2864, %v2862
    %v2907 = vpack.c.b16 %v2865, %v2863
    %v2908 = vpack.c.b16 %v2868, %v2866
    %v2909 = vpack.c.b16 %v2869, %v2867
    %v2910 = vpack.c.b16 %v2872, %v2870
    %v2911 = vpack.c.b16 %v2873, %v2871
    %v2912 = vpack.c.b16 %v2876, %v2874
    %v2913 = vpack.c.b16 %v2877, %v2875
    %v2914 = vpack.c.b16 %v2880, %v2878
    %v2915 = vpack.c.b16 %v2881, %v2879
    %v2916 = vpack.c.b16 %v2884, %v2882
    %v2917 = vpack.c.b16 %v2885, %v2883
    %2950 = vmatprep.subr.bf16.mxu0 %v2887
    %2951 = vmatpush1.bf16.msra.mxu0 %v2886
    %2952 = vmatprep.subr.bf16.mxu0 %v2889
    %2953 = vmatpush1.bf16.msra.mxu0 %v2888
    %2954 = vmatprep.subr.bf16.mxu0 %v2891
    %2955 = vmatpush1.bf16.msra.mxu0 %v2890
    %2956 = vmatprep.subr.bf16.mxu0 %v2893
    %2957 = vmatpush1.bf16.msra.mxu0 %v2892
    %2958 = vmatprep.subr.bf16.mxu0 %v2895
    %2959 = vmatpush1.bf16.msra.mxu0 %v2894
    %2960 = vmatprep.subr.bf16.mxu0 %v2897
    %2961 = vmatpush1.bf16.msra.mxu0 %v2896
    %2962 = vmatprep.subr.bf16.mxu0 %v2899
    %2963 = vmatpush1.bf16.msra.mxu0 %v2898
    %2964 = vmatprep.subr.bf16.mxu0 %v2901
    %2965 = vmatpush1.bf16.msra.mxu0 %v2900
    %2966 = vmatprep.subr.bf16.mxu0 %v2903
    %2967 = vmatpush1.bf16.msra.mxu0 %v2902
    %2968 = vmatprep.subr.bf16.mxu0 %v2905
    %2969 = vmatpush1.bf16.msra.mxu0 %v2904
    %2970 = vmatprep.subr.bf16.mxu0 %v2907
    %2971 = vmatpush1.bf16.msra.mxu0 %v2906
    %2972 = vmatprep.subr.bf16.mxu0 %v2909
    %2973 = vmatpush1.bf16.msra.mxu0 %v2908
    %2974 = vmatprep.subr.bf16.mxu0 %v2911
    %2975 = vmatpush1.bf16.msra.mxu0 %v2910
    %2976 = vmatprep.subr.bf16.mxu0 %v2913
    %2977 = vmatpush1.bf16.msra.mxu0 %v2912
    %2978 = vmatprep.subr.bf16.mxu0 %v2915
    %2979 = vmatpush1.bf16.msra.mxu0 %v2914
    %2980 = vmatprep.subr.bf16.mxu0 %v2917
    %2981 = vmatpush1.bf16.msra.mxu0 %v2916
    %2982 = vmatprep.mubr.bf16.mxu0 %v2745
    %2983 = vmatmul.mubr.bf16.gmra.mrb[0].mxu0 %v2744
    %v2984 = vpop.f32.mrb[0].mxu0
    %v2985 = vadd.f32 %v2783, %v2984
    %v2986 = vpop.f32.mrb[0].mxu0
    %v2987 = vadd.f32 %v2787, %v2986
    %v2988 = vpop.f32.mrb[0].mxu0
    %v2989 = vadd.f32 %v2783, %v2988
    %v2990 = vpop.f32.mrb[0].mxu0
    %v2991 = vadd.f32 %v2787, %v2990
    %2992 = vdwg.mxu0
    %v2993 = vmul.f32 %v2987, 0.5
    %v2994 = vmul.f32 %v2991, 0.5
    %v2995 = vmul.f32 %v2993, 1.442695
    %v2996 = vpow.pop %v2995
    %v2997 = vmul.f32 %v2994, 1.442695
    %v2998 = vpow.pop %v2997
    %v2999 = vld [vmem:[#allocation8] sm:$0xff]
    %v3000 = vld [vmem:[#allocation8 + $0x8] sm:$0xff]
    %v3001 = vmul.f32 %v2996, %v2999
    %v3002 = vmul.f32 %v2998, %v3000
    %v3003 = vadd.f32 %v2985, %v3001
    %v3004 = vadd.f32 %v2989, %v3002
    %3005 = vst [vmem:[#allocation19] sm:$0xff] %v3003
    %3006 = vst [vmem:[#allocation19 + $0x8] sm:$0xff] %v3004
    // Predicated region
    $region82: #{tpu_custom_call.1} parent=1 // pred_check
      _
    $region83: #{tpu_custom_call.1} parent=1 // pred_check_branch
      %3008 = sbr.rel (0) target = $region85
    $region84: #{tpu_custom_call.1} parent=1 // pred_region
      %s3010 = ssub.s32 256, 256
      %3011 = vsyncadd [#allocation4], %s3010
      %s3012 = sshll.u32 [#allocation19], 4
      %s3013 = int_to_ptr.vmem [resolvable:$true] %s3012
      %3018 = dma.vmem_to_hbm [thread:$0]  %s3013, 256, %s10, [#allocation4], 128, 128, 8
    $region85: #{tpu_custom_call.1} parent=1 // pred_fallthru
      _
    // Predicated region
    $region86: #{tpu_custom_call.1} parent=1 // pred_check
      _
    $region87: #{tpu_custom_call.1} parent=1 // pred_check_branch
      %3020 = sbr.rel (0) target = $region89
    $region88: #{tpu_custom_call.1} parent=1 // pred_region
      %3021 = dma.done [#allocation4], 256
    $region89: #{tpu_custom_call.1} parent=1 // pred_fallthru
      _
    %3022 = vsyncpa [#allocation3], 1
    %3023 = vsyncpa [#allocation6], 1
    %3024 = vsyncpa [#allocation9], 1
    %3025 = vsyncpa [#allocation12], 1
    %3026 = vsyncpa [#allocation15], 1
    %3027 = vsyncpa [#allocation18], 1
    %3028 = vsyncpa [#allocation4], 1

</llo_original>
